<compile_context>
chip_gen: v6e
topology: v6e:2x2x1
jax: 0.10.0
libtpu: 0.0.40
codegen_flags: <defaults>
</compile_context>

<pallas_src>
import math

import jax
import jax.numpy as jnp
from jax.experimental import pallas as pl
from jax.experimental.pallas import tpu as pltpu


# ------------------------- static problem configuration ----------------------
H, W = 10, 10                    # input spatial size (x1 is (1, 1, 10, 10))
KH, KW = 5, 5                    # kernel size of both valid layers
C_OUT = 4                        # output channels of both valid layers
PAD_H, PAD_W = KH - 1, KW - 1    # edge pad of a padding=0 transposed conv
SH1, SW1 = 1, 1                  # convtranspose_out_channel stride
SH3, SW3 = 5, 3                  # convtranspose_stride stride
OH1, OW1 = (H - 1) * SH1 + KH, (W - 1) * SW1 + KW      # (14, 14)
OH3, OW3 = (H - 1) * SH3 + KH, (W - 1) * SW3 + KW      # (50, 32)
HP1, WP1 = OH1 + KH - 1, OW1 + KW - 1                  # (18, 18)
HP3, WP3 = OH3 + KH - 1, OW3 + KW - 1                  # (54, 36)
NTAP = KH * KW                                         # 25


# --------------------------------- kernel ------------------------------------

def _conv_taps(xp_ref, tab_ref, oh, ow, o_ref):
    """Channel-vectorized tap accumulation.

    o_ref[y, c*ow + x] = bias[c] + sum_{kh,kw} wflip[c,kh,kw] * xp[y+kh, x+kw]

    tab_ref is (NTAP+1, C_OUT*ow): row kh*KW+kw holds the (already flipped)
    weight wflip[c,kh,kw] replicated over lanes [c*ow, (c+1)*ow); row NTAP is
    the bias, replicated the same way.
    """
    cw = C_OUT * ow
    tab = tab_ref[...]                                        # (NTAP+1, cw)
    acc = jnp.broadcast_to(tab[NTAP:NTAP + 1, :], (oh, cw))   # bias init
    for kw in range(KW):
        # Lane shift hoisted: 5 shifted views total (not 25), each replicated
        # 4x along lanes once so every kh tap / channel reuses it.
        col = xp_ref[:, kw:kw + ow]                           # (hp, ow)
        col4 = jnp.concatenate([col] * C_OUT, axis=1)         # (hp, cw)
        for kh in range(KH):
            r = kh * KW + kw
            acc = acc + tab[r:r + 1, :] * col4[kh:kh + oh, :]  # 1 FMA per tap
    o_ref[...] = acc.astype(o_ref.dtype)                      # single lane-dense store


def _fused_kernel(x_ref, tab1_ref, tab3_ref, o1_ref, o3_ref, xp1_ref, xp3_ref):
    # Single invocation: both transposed convs share the (10, 10) input in VMEM.
    # TODO(synk): a per-TensorCore split (v7x) costs more than it saves at this
    # size, so the kernel stays grid-less.
    x = x_ref[...]                                            # (10, 10) f32

    # ---- conv #1 (stride 1): dilation is a no-op -> zero + one sub-block store
    xp1_ref[...] = jnp.zeros((HP1, WP1), jnp.float32)
    xp1_ref[PAD_H:PAD_H + H, PAD_W:PAD_W + W] = x

    # ---- conv #3 (stride (5,3)): width dilation via 10 mask passes over a tiny
    # (10, 36) buffer, then 10 static row stores for the height dilation
    # (row-store fallback -- no reliance on strided ref stores).
    lane = jax.lax.broadcasted_iota(jnp.int32, (H, WP3), 1)
    xw = jnp.zeros((H, WP3), jnp.float32)
    for j in range(W):                                        # static, unrolled
        xw = xw + jnp.where(lane == PAD_W + j * SW3, x[:, j:j + 1], 0.0)
    xp3_ref[...] = jnp.zeros((HP3, WP3), jnp.float32)
    for i in range(H):                                        # static, unrolled
        r = PAD_H + i * SH3
        xp3_ref[r:r + 1, :] = xw[i:i + 1, :]

    _conv_taps(xp1_ref, tab1_ref, OH1, OW1, o1_ref)           # v1: (14, 56)
    _conv_taps(xp3_ref, tab3_ref, OH3, OW3, o3_ref)           # v3: (50, 128)


def _fused_convtranspose(x2d, tab1, tab3):
    return pl.pallas_call(
        _fused_kernel,
        out_shape=(
            jax.ShapeDtypeStruct((OH1, C_OUT * OW1), jnp.float32),   # (14, 56)
            jax.ShapeDtypeStruct((OH3, C_OUT * OW3), jnp.float32),   # (50, 128)
        ),
        in_specs=[
            pl.BlockSpec(memory_space=pltpu.MemorySpace.VMEM),   # x (10, 10)
            pl.BlockSpec(memory_space=pltpu.MemorySpace.VMEM),   # tab1 (26, 56)
            pl.BlockSpec(memory_space=pltpu.MemorySpace.VMEM),   # tab3 (26, 128)
        ],
        out_specs=(
            pl.BlockSpec(memory_space=pltpu.MemorySpace.VMEM),
            pl.BlockSpec(memory_space=pltpu.MemorySpace.VMEM),
        ),
        scratch_shapes=[
            pltpu.VMEM((HP1, WP1), jnp.float32),   # padded input, conv #1
            pltpu.VMEM((HP3, WP3), jnp.float32),   # dilated/padded input, conv #3
        ],
    )(x2d, tab1, tab3)


# ------------------------------- "Model" glue ---------------------------------

def _make_tab(w, b, ow):
    """(NTAP+1, C_OUT*ow) lane-replicated weight/bias table (flip pre-applied)."""
    wflip = w[0, :, ::-1, ::-1].reshape(C_OUT, NTAP)          # wflip[c, kh*5+kw]
    wtab = jnp.broadcast_to(wflip.T[:, :, None],
                            (NTAP, C_OUT, ow)).reshape(NTAP, C_OUT * ow)
    brow = jnp.broadcast_to(b[:, None], (C_OUT, ow)).reshape(1, C_OUT * ow)
    return jnp.concatenate([wtab, brow], axis=0).astype(jnp.float32)


@jax.jit
def model_forward(x1, params):
    """Mirrors Model.forward for the parts that are well-defined.

    v1 = convtranspose_out_channel(x1) -> (1, 4, 14, 14)
    v3 = convtranspose_stride(x1)      -> (1, 4, 50, 32)
    # TODO(synk): v2 (output height 0), v4 (invalid nested padding) and
    # v5 = v1 + v2 + v3 + v4 (incompatible shapes) raise in the PyTorch
    # reference and are therefore not reproduced.
    """
    w1, b1 = params["out_channel"]
    w3, b3 = params["stride"]
    tab1 = _make_tab(w1, b1, OW1)                             # (26, 56)
    tab3 = _make_tab(w3, b3, OW3)                             # (26, 128)
    x2d = x1.reshape(H, W).astype(jnp.float32)                # N = Cin = 1
    o1, o3 = _fused_convtranspose(x2d, tab1, tab3)
    # Lane-dense (OH, C*OW) slabs -> (1, C, OH, OW) in the wrapper.
    v1 = o1.reshape(OH1, C_OUT, OW1).transpose(1, 0, 2)[None]
    v3 = o3.reshape(OH3, C_OUT, OW3).transpose(1, 0, 2)[None]
    return v1, v3


def conv_transpose2d_ref(x, w, b, stride, padding):
    """Pure-JAX reference (lax) for correctness checking."""
    kh, kw = w.shape[2], w.shape[3]
    rhs = jnp.transpose(w[:, :, ::-1, ::-1], (1, 0, 2, 3))  # (Cout, Cin, KH, KW)
    out = jax.lax.conv_general_dilated(
        x, rhs, window_strides=(1, 1),
        padding=((kh - 1 - padding[0],) * 2, (kw - 1 - padding[1],) * 2),
        lhs_dilation=stride,
        dimension_numbers=("NCHW", "OIHW", "NCHW"))
    return out + b[None, :, None, None]


def init_convT(key, cin, cout, kh, kw):
    """Deterministic PyTorch-style uniform init for ConvTranspose2d(cin, cout, (kh, kw))."""
    kw_key, kb_key = jax.random.split(key)
    bound = 1.0 / math.sqrt(cout * kh * kw)
    w = jax.random.uniform(kw_key, (cin, cout, kh, kw), jnp.float32, -bound, bound)
    b = jax.random.uniform(kb_key, (cout,), jnp.float32, -bound, bound)
    return w, b


if __name__ == "__main__":
    root = jax.random.PRNGKey(0)
    kx, k1, k2, k3, k4 = jax.random.split(root, 5)

    # Input exactly as in the reference script: torch.randn(1, 1, 10, 10).
    x1 = jax.random.normal(kx, (1, 1, 10, 10), jnp.float32)

    params = {
        "out_channel": init_convT(k1, 1, 4, 5, 5),       # ConvTranspose2d(1, 4, 5)
        "kernel_size": init_convT(k2, 1, 4, 20, 120),    # unused (invalid config, see TODO)
        "stride": init_convT(k3, 1, 4, 5, 5),            # ConvTranspose2d(1, 4, 5, stride=[5,3])
        "pad": init_convT(k4, 1, 4, 5, 5),               # unused (invalid config, see TODO)
    }

    v1, v3 = model_forward(x1, params)
    v1 = jax.block_until_ready(v1)
    v3 = jax.block_until_ready(v3)

    assert v1.shape == (1, 4, 14, 14), v1.shape
    assert v3.shape == (1, 4, 50, 32), v3.shape

    # Validate the fused Pallas kernel against the pure-JAX reference.
    r1 = conv_transpose2d_ref(x1, *params["out_channel"], stride=(1, 1), padding=(0, 0))
    r3 = conv_transpose2d_ref(x1, *params["stride"], stride=(5, 3), padding=(0, 0))
    assert jnp.allclose(v1, r1, atol=1e-4, rtol=1e-4), float(jnp.max(jnp.abs(v1 - r1)))
    assert jnp.allclose(v3, r3, atol=1e-4, rtol=1e-4), float(jnp.max(jnp.abs(v3 - r3)))

    print("KERNEL_OK")
</pallas_src>

<mosaic_0001>
module attributes {stable_mosaic.version = 11 : i64} {
  func.func @_fused_kernel(%arg0: memref<10x10xf32, #tpu.memory_space<vmem>>, %arg1: memref<26x56xf32, #tpu.memory_space<vmem>>, %arg2: memref<26x128xf32, #tpu.memory_space<vmem>>, %arg3: memref<14x56xf32, #tpu.memory_space<vmem>>, %arg4: memref<50x128xf32, #tpu.memory_space<vmem>>, %arg5: memref<18x18xf32, #tpu.memory_space<vmem>>, %arg6: memref<54x36xf32, #tpu.memory_space<vmem>>) attributes {dimension_semantics = [], scalar_prefetch = 0 : i64, scratch_operands = 2 : i64, tpu.core_type = #tpu.core_type<tc>} {
    %c0 = arith.constant 0 : index
    %c0_0 = arith.constant 0 : index
    %0 = vector.load %arg0[%c0, %c0_0] : memref<10x10xf32, #tpu.memory_space<vmem>>, vector<10x10xf32>
    %cst = arith.constant 0.000000e+00 : f32
    %1 = vector.broadcast %cst : f32 to vector<18x18xf32>
    %c0_1 = arith.constant 0 : index
    %c0_2 = arith.constant 0 : index
    %2 = vector.load %arg5[%c0_1, %c0_2] : memref<18x18xf32, #tpu.memory_space<vmem>>, vector<18x18xf32>
    tpu.vector_store %arg5[%c0_1, %c0_2], %1 {strides = array<i32>} : memref<18x18xf32, #tpu.memory_space<vmem>>, vector<18x18xf32>,
    %c4 = arith.constant 4 : index
    %c4_3 = arith.constant 4 : index
    %3 = vector.load %arg5[%c4, %c4_3] : memref<18x18xf32, #tpu.memory_space<vmem>>, vector<10x10xf32>
    tpu.vector_store %arg5[%c4, %c4_3], %0 {strides = array<i32>} : memref<18x18xf32, #tpu.memory_space<vmem>>, vector<10x10xf32>,
    %4 = tpu.iota {dimensions = array<i32: 1>} : vector<10x36xi32>
    %cst_4 = arith.constant 0.000000e+00 : f32
    %5 = vector.broadcast %cst_4 : f32 to vector<10x36xf32>
    %c4_i32 = arith.constant 4 : i32
    %6 = vector.broadcast %c4_i32 : i32 to vector<10x36xi32>
    %7 = arith.cmpi eq, %4, %6 : vector<10x36xi32>
    %8 = vector.extract_strided_slice %0 {offsets = [0, 0], sizes = [10, 1], strides = [1, 1]} : vector<10x10xf32> to vector<10x1xf32>
    %cst_5 = arith.constant 0.000000e+00 : f32
    %9 = vector.shape_cast %8 : vector<10x1xf32> to vector<10x1xf32>
    %10 = vector.broadcast %9 : vector<10x1xf32> to vector<10x36xf32>
    %11 = vector.broadcast %cst_5 : f32 to vector<10x36xf32>
    %12 = arith.select %7, %10, %11 : vector<10x36xi1>, vector<10x36xf32>
    %13 = arith.addf %5, %12 : vector<10x36xf32>
    %c7_i32 = arith.constant 7 : i32
    %14 = vector.broadcast %c7_i32 : i32 to vector<10x36xi32>
    %15 = arith.cmpi eq, %4, %14 : vector<10x36xi32>
    %16 = vector.extract_strided_slice %0 {offsets = [0, 1], sizes = [10, 1], strides = [1, 1]} : vector<10x10xf32> to vector<10x1xf32>
    %cst_6 = arith.constant 0.000000e+00 : f32
    %17 = vector.shape_cast %16 : vector<10x1xf32> to vector<10x1xf32>
    %18 = vector.broadcast %17 : vector<10x1xf32> to vector<10x36xf32>
    %19 = vector.broadcast %cst_6 : f32 to vector<10x36xf32>
    %20 = arith.select %15, %18, %19 : vector<10x36xi1>, vector<10x36xf32>
    %21 = arith.addf %13, %20 : vector<10x36xf32>
    %c10_i32 = arith.constant 10 : i32
    %22 = vector.broadcast %c10_i32 : i32 to vector<10x36xi32>
    %23 = arith.cmpi eq, %4, %22 : vector<10x36xi32>
    %24 = vector.extract_strided_slice %0 {offsets = [0, 2], sizes = [10, 1], strides = [1, 1]} : vector<10x10xf32> to vector<10x1xf32>
    %cst_7 = arith.constant 0.000000e+00 : f32
    %25 = vector.shape_cast %24 : vector<10x1xf32> to vector<10x1xf32>
    %26 = vector.broadcast %25 : vector<10x1xf32> to vector<10x36xf32>
    %27 = vector.broadcast %cst_7 : f32 to vector<10x36xf32>
    %28 = arith.select %23, %26, %27 : vector<10x36xi1>, vector<10x36xf32>
    %29 = arith.addf %21, %28 : vector<10x36xf32>
    %c13_i32 = arith.constant 13 : i32
    %30 = vector.broadcast %c13_i32 : i32 to vector<10x36xi32>
    %31 = arith.cmpi eq, %4, %30 : vector<10x36xi32>
    %32 = vector.extract_strided_slice %0 {offsets = [0, 3], sizes = [10, 1], strides = [1, 1]} : vector<10x10xf32> to vector<10x1xf32>
    %cst_8 = arith.constant 0.000000e+00 : f32
    %33 = vector.shape_cast %32 : vector<10x1xf32> to vector<10x1xf32>
    %34 = vector.broadcast %33 : vector<10x1xf32> to vector<10x36xf32>
    %35 = vector.broadcast %cst_8 : f32 to vector<10x36xf32>
    %36 = arith.select %31, %34, %35 : vector<10x36xi1>, vector<10x36xf32>
    %37 = arith.addf %29, %36 : vector<10x36xf32>
    %c16_i32 = arith.constant 16 : i32
    %38 = vector.broadcast %c16_i32 : i32 to vector<10x36xi32>
    %39 = arith.cmpi eq, %4, %38 : vector<10x36xi32>
    %40 = vector.extract_strided_slice %0 {offsets = [0, 4], sizes = [10, 1], strides = [1, 1]} : vector<10x10xf32> to vector<10x1xf32>
    %cst_9 = arith.constant 0.000000e+00 : f32
    %41 = vector.shape_cast %40 : vector<10x1xf32> to vector<10x1xf32>
    %42 = vector.broadcast %41 : vector<10x1xf32> to vector<10x36xf32>
    %43 = vector.broadcast %cst_9 : f32 to vector<10x36xf32>
    %44 = arith.select %39, %42, %43 : vector<10x36xi1>, vector<10x36xf32>
    %45 = arith.addf %37, %44 : vector<10x36xf32>
    %c19_i32 = arith.constant 19 : i32
    %46 = vector.broadcast %c19_i32 : i32 to vector<10x36xi32>
    %47 = arith.cmpi eq, %4, %46 : vector<10x36xi32>
    %48 = vector.extract_strided_slice %0 {offsets = [0, 5], sizes = [10, 1], strides = [1, 1]} : vector<10x10xf32> to vector<10x1xf32>
    %cst_10 = arith.constant 0.000000e+00 : f32
    %49 = vector.shape_cast %48 : vector<10x1xf32> to vector<10x1xf32>
    %50 = vector.broadcast %49 : vector<10x1xf32> to vector<10x36xf32>
    %51 = vector.broadcast %cst_10 : f32 to vector<10x36xf32>
    %52 = arith.select %47, %50, %51 : vector<10x36xi1>, vector<10x36xf32>
    %53 = arith.addf %45, %52 : vector<10x36xf32>
    %c22_i32 = arith.constant 22 : i32
    %54 = vector.broadcast %c22_i32 : i32 to vector<10x36xi32>
    %55 = arith.cmpi eq, %4, %54 : vector<10x36xi32>
    %56 = vector.extract_strided_slice %0 {offsets = [0, 6], sizes = [10, 1], strides = [1, 1]} : vector<10x10xf32> to vector<10x1xf32>
    %cst_11 = arith.constant 0.000000e+00 : f32
    %57 = vector.shape_cast %56 : vector<10x1xf32> to vector<10x1xf32>
    %58 = vector.broadcast %57 : vector<10x1xf32> to vector<10x36xf32>
    %59 = vector.broadcast %cst_11 : f32 to vector<10x36xf32>
    %60 = arith.select %55, %58, %59 : vector<10x36xi1>, vector<10x36xf32>
    %61 = arith.addf %53, %60 : vector<10x36xf32>
    %c25_i32 = arith.constant 25 : i32
    %62 = vector.broadcast %c25_i32 : i32 to vector<10x36xi32>
    %63 = arith.cmpi eq, %4, %62 : vector<10x36xi32>
    %64 = vector.extract_strided_slice %0 {offsets = [0, 7], sizes = [10, 1], strides = [1, 1]} : vector<10x10xf32> to vector<10x1xf32>
    %cst_12 = arith.constant 0.000000e+00 : f32
    %65 = vector.shape_cast %64 : vector<10x1xf32> to vector<10x1xf32>
    %66 = vector.broadcast %65 : vector<10x1xf32> to vector<10x36xf32>
    %67 = vector.broadcast %cst_12 : f32 to vector<10x36xf32>
    %68 = arith.select %63, %66, %67 : vector<10x36xi1>, vector<10x36xf32>
    %69 = arith.addf %61, %68 : vector<10x36xf32>
    %c28_i32 = arith.constant 28 : i32
    %70 = vector.broadcast %c28_i32 : i32 to vector<10x36xi32>
    %71 = arith.cmpi eq, %4, %70 : vector<10x36xi32>
    %72 = vector.extract_strided_slice %0 {offsets = [0, 8], sizes = [10, 1], strides = [1, 1]} : vector<10x10xf32> to vector<10x1xf32>
    %cst_13 = arith.constant 0.000000e+00 : f32
    %73 = vector.shape_cast %72 : vector<10x1xf32> to vector<10x1xf32>
    %74 = vector.broadcast %73 : vector<10x1xf32> to vector<10x36xf32>
    %75 = vector.broadcast %cst_13 : f32 to vector<10x36xf32>
    %76 = arith.select %71, %74, %75 : vector<10x36xi1>, vector<10x36xf32>
    %77 = arith.addf %69, %76 : vector<10x36xf32>
    %c31_i32 = arith.constant 31 : i32
    %78 = vector.broadcast %c31_i32 : i32 to vector<10x36xi32>
    %79 = arith.cmpi eq, %4, %78 : vector<10x36xi32>
    %80 = vector.extract_strided_slice %0 {offsets = [0, 9], sizes = [10, 1], strides = [1, 1]} : vector<10x10xf32> to vector<10x1xf32>
    %cst_14 = arith.constant 0.000000e+00 : f32
    %81 = vector.shape_cast %80 : vector<10x1xf32> to vector<10x1xf32>
    %82 = vector.broadcast %81 : vector<10x1xf32> to vector<10x36xf32>
    %83 = vector.broadcast %cst_14 : f32 to vector<10x36xf32>
    %84 = arith.select %79, %82, %83 : vector<10x36xi1>, vector<10x36xf32>
    %85 = arith.addf %77, %84 : vector<10x36xf32>
    %cst_15 = arith.constant 0.000000e+00 : f32
    %86 = vector.broadcast %cst_15 : f32 to vector<54x36xf32>
    %c0_16 = arith.constant 0 : index
    %c0_17 = arith.constant 0 : index
    %87 = vector.load %arg6[%c0_16, %c0_17] : memref<54x36xf32, #tpu.memory_space<vmem>>, vector<54x36xf32>
    tpu.vector_store %arg6[%c0_16, %c0_17], %86 {strides = array<i32>} : memref<54x36xf32, #tpu.memory_space<vmem>>, vector<54x36xf32>,
    %88 = vector.extract_strided_slice %85 {offsets = [0, 0], sizes = [1, 36], strides = [1, 1]} : vector<10x36xf32> to vector<1x36xf32>
    %c4_18 = arith.constant 4 : index
    %c0_19 = arith.constant 0 : index
    %89 = vector.load %arg6[%c4_18, %c0_19] : memref<54x36xf32, #tpu.memory_space<vmem>>, vector<1x36xf32>
    tpu.vector_store %arg6[%c4_18, %c0_19], %88 {strides = array<i32>} : memref<54x36xf32, #tpu.memory_space<vmem>>, vector<1x36xf32>,
    %90 = vector.extract_strided_slice %85 {offsets = [1, 0], sizes = [1, 36], strides = [1, 1]} : vector<10x36xf32> to vector<1x36xf32>
    %c9 = arith.constant 9 : index
    %c0_20 = arith.constant 0 : index
    %91 = vector.load %arg6[%c9, %c0_20] : memref<54x36xf32, #tpu.memory_space<vmem>>, vector<1x36xf32>
    tpu.vector_store %arg6[%c9, %c0_20], %90 {strides = array<i32>} : memref<54x36xf32, #tpu.memory_space<vmem>>, vector<1x36xf32>,
    %92 = vector.extract_strided_slice %85 {offsets = [2, 0], sizes = [1, 36], strides = [1, 1]} : vector<10x36xf32> to vector<1x36xf32>
    %c14 = arith.constant 14 : index
    %c0_21 = arith.constant 0 : index
    %93 = vector.load %arg6[%c14, %c0_21] : memref<54x36xf32, #tpu.memory_space<vmem>>, vector<1x36xf32>
    tpu.vector_store %arg6[%c14, %c0_21], %92 {strides = array<i32>} : memref<54x36xf32, #tpu.memory_space<vmem>>, vector<1x36xf32>,
    %94 = vector.extract_strided_slice %85 {offsets = [3, 0], sizes = [1, 36], strides = [1, 1]} : vector<10x36xf32> to vector<1x36xf32>
    %c19 = arith.constant 19 : index
    %c0_22 = arith.constant 0 : index
    %95 = vector.load %arg6[%c19, %c0_22] : memref<54x36xf32, #tpu.memory_space<vmem>>, vector<1x36xf32>
    tpu.vector_store %arg6[%c19, %c0_22], %94 {strides = array<i32>} : memref<54x36xf32, #tpu.memory_space<vmem>>, vector<1x36xf32>,
    %96 = vector.extract_strided_slice %85 {offsets = [4, 0], sizes = [1, 36], strides = [1, 1]} : vector<10x36xf32> to vector<1x36xf32>
    %c24 = arith.constant 24 : index
    %c0_23 = arith.constant 0 : index
    %97 = vector.load %arg6[%c24, %c0_23] : memref<54x36xf32, #tpu.memory_space<vmem>>, vector<1x36xf32>
    tpu.vector_store %arg6[%c24, %c0_23], %96 {strides = array<i32>} : memref<54x36xf32, #tpu.memory_space<vmem>>, vector<1x36xf32>,
    %98 = vector.extract_strided_slice %85 {offsets = [5, 0], sizes = [1, 36], strides = [1, 1]} : vector<10x36xf32> to vector<1x36xf32>
    %c29 = arith.constant 29 : index
    %c0_24 = arith.constant 0 : index
    %99 = vector.load %arg6[%c29, %c0_24] : memref<54x36xf32, #tpu.memory_space<vmem>>, vector<1x36xf32>
    tpu.vector_store %arg6[%c29, %c0_24], %98 {strides = array<i32>} : memref<54x36xf32, #tpu.memory_space<vmem>>, vector<1x36xf32>,
    %100 = vector.extract_strided_slice %85 {offsets = [6, 0], sizes = [1, 36], strides = [1, 1]} : vector<10x36xf32> to vector<1x36xf32>
    %c34 = arith.constant 34 : index
    %c0_25 = arith.constant 0 : index
    %101 = vector.load %arg6[%c34, %c0_25] : memref<54x36xf32, #tpu.memory_space<vmem>>, vector<1x36xf32>
    tpu.vector_store %arg6[%c34, %c0_25], %100 {strides = array<i32>} : memref<54x36xf32, #tpu.memory_space<vmem>>, vector<1x36xf32>,
    %102 = vector.extract_strided_slice %85 {offsets = [7, 0], sizes = [1, 36], strides = [1, 1]} : vector<10x36xf32> to vector<1x36xf32>
    %c39 = arith.constant 39 : index
    %c0_26 = arith.constant 0 : index
    %103 = vector.load %arg6[%c39, %c0_26] : memref<54x36xf32, #tpu.memory_space<vmem>>, vector<1x36xf32>
    tpu.vector_store %arg6[%c39, %c0_26], %102 {strides = array<i32>} : memref<54x36xf32, #tpu.memory_space<vmem>>, vector<1x36xf32>,
    %104 = vector.extract_strided_slice %85 {offsets = [8, 0], sizes = [1, 36], strides = [1, 1]} : vector<10x36xf32> to vector<1x36xf32>
    %c44 = arith.constant 44 : index
    %c0_27 = arith.constant 0 : index
    %105 = vector.load %arg6[%c44, %c0_27] : memref<54x36xf32, #tpu.memory_space<vmem>>, vector<1x36xf32>
    tpu.vector_store %arg6[%c44, %c0_27], %104 {strides = array<i32>} : memref<54x36xf32, #tpu.memory_space<vmem>>, vector<1x36xf32>,
    %106 = vector.extract_strided_slice %85 {offsets = [9, 0], sizes = [1, 36], strides = [1, 1]} : vector<10x36xf32> to vector<1x36xf32>
    %c49 = arith.constant 49 : index
    %c0_28 = arith.constant 0 : index
    %107 = vector.load %arg6[%c49, %c0_28] : memref<54x36xf32, #tpu.memory_space<vmem>>, vector<1x36xf32>
    tpu.vector_store %arg6[%c49, %c0_28], %106 {strides = array<i32>} : memref<54x36xf32, #tpu.memory_space<vmem>>, vector<1x36xf32>,
    %c0_29 = arith.constant 0 : index
    %c0_30 = arith.constant 0 : index
    %108 = vector.load %arg1[%c0_29, %c0_30] : memref<26x56xf32, #tpu.memory_space<vmem>>, vector<26x56xf32>
    %109 = vector.extract_strided_slice %108 {offsets = [25, 0], sizes = [1, 56], strides = [1, 1]} : vector<26x56xf32> to vector<1x56xf32>
    %110 = vector.shape_cast %109 : vector<1x56xf32> to vector<1x56xf32>
    %111 = vector.broadcast %110 : vector<1x56xf32> to vector<14x56xf32>
    %c0_31 = arith.constant 0 : index
    %c0_32 = arith.constant 0 : index
    %112 = vector.load %arg5[%c0_31, %c0_32] : memref<18x18xf32, #tpu.memory_space<vmem>>, vector<18x14xf32>
    %113 = tpu.concatenate %112, %112, %112, %112 in 1 : vector<18x14xf32>, vector<18x14xf32>, vector<18x14xf32>, vector<18x14xf32> -> vector<18x56xf32>
    %114 = vector.extract_strided_slice %108 {offsets = [0, 0], sizes = [1, 56], strides = [1, 1]} : vector<26x56xf32> to vector<1x56xf32>
    %115 = vector.extract_strided_slice %113 {offsets = [0, 0], sizes = [14, 56], strides = [1, 1]} : vector<18x56xf32> to vector<14x56xf32>
    %116 = vector.broadcast %114 : vector<1x56xf32> to vector<14x56xf32>
    %117 = arith.mulf %116, %115 : vector<14x56xf32>
    %118 = arith.addf %111, %117 : vector<14x56xf32>
    %119 = vector.extract_strided_slice %108 {offsets = [5, 0], sizes = [1, 56], strides = [1, 1]} : vector<26x56xf32> to vector<1x56xf32>
    %120 = vector.extract_strided_slice %113 {offsets = [1, 0], sizes = [14, 56], strides = [1, 1]} : vector<18x56xf32> to vector<14x56xf32>
    %121 = vector.broadcast %119 : vector<1x56xf32> to vector<14x56xf32>
    %122 = arith.mulf %121, %120 : vector<14x56xf32>
    %123 = arith.addf %118, %122 : vector<14x56xf32>
    %124 = vector.extract_strided_slice %108 {offsets = [10, 0], sizes = [1, 56], strides = [1, 1]} : vector<26x56xf32> to vector<1x56xf32>
    %125 = vector.extract_strided_slice %113 {offsets = [2, 0], sizes = [14, 56], strides = [1, 1]} : vector<18x56xf32> to vector<14x56xf32>
    %126 = vector.broadcast %124 : vector<1x56xf32> to vector<14x56xf32>
    %127 = arith.mulf %126, %125 : vector<14x56xf32>
    %128 = arith.addf %123, %127 : vector<14x56xf32>
    %129 = vector.extract_strided_slice %108 {offsets = [15, 0], sizes = [1, 56], strides = [1, 1]} : vector<26x56xf32> to vector<1x56xf32>
    %130 = vector.extract_strided_slice %113 {offsets = [3, 0], sizes = [14, 56], strides = [1, 1]} : vector<18x56xf32> to vector<14x56xf32>
    %131 = vector.broadcast %129 : vector<1x56xf32> to vector<14x56xf32>
    %132 = arith.mulf %131, %130 : vector<14x56xf32>
    %133 = arith.addf %128, %132 : vector<14x56xf32>
    %134 = vector.extract_strided_slice %108 {offsets = [20, 0], sizes = [1, 56], strides = [1, 1]} : vector<26x56xf32> to vector<1x56xf32>
    %135 = vector.extract_strided_slice %113 {offsets = [4, 0], sizes = [14, 56], strides = [1, 1]} : vector<18x56xf32> to vector<14x56xf32>
    %136 = vector.broadcast %134 : vector<1x56xf32> to vector<14x56xf32>
    %137 = arith.mulf %136, %135 : vector<14x56xf32>
    %138 = arith.addf %133, %137 : vector<14x56xf32>
    %c0_33 = arith.constant 0 : index
    %c1 = arith.constant 1 : index
    %139 = vector.load %arg5[%c0_33, %c1] : memref<18x18xf32, #tpu.memory_space<vmem>>, vector<18x14xf32>
    %140 = tpu.concatenate %139, %139, %139, %139 in 1 : vector<18x14xf32>, vector<18x14xf32>, vector<18x14xf32>, vector<18x14xf32> -> vector<18x56xf32>
    %141 = vector.extract_strided_slice %108 {offsets = [1, 0], sizes = [1, 56], strides = [1, 1]} : vector<26x56xf32> to vector<1x56xf32>
    %142 = vector.extract_strided_slice %140 {offsets = [0, 0], sizes = [14, 56], strides = [1, 1]} : vector<18x56xf32> to vector<14x56xf32>
    %143 = vector.broadcast %141 : vector<1x56xf32> to vector<14x56xf32>
    %144 = arith.mulf %143, %142 : vector<14x56xf32>
    %145 = arith.addf %138, %144 : vector<14x56xf32>
    %146 = vector.extract_strided_slice %108 {offsets = [6, 0], sizes = [1, 56], strides = [1, 1]} : vector<26x56xf32> to vector<1x56xf32>
    %147 = vector.extract_strided_slice %140 {offsets = [1, 0], sizes = [14, 56], strides = [1, 1]} : vector<18x56xf32> to vector<14x56xf32>
    %148 = vector.broadcast %146 : vector<1x56xf32> to vector<14x56xf32>
    %149 = arith.mulf %148, %147 : vector<14x56xf32>
    %150 = arith.addf %145, %149 : vector<14x56xf32>
    %151 = vector.extract_strided_slice %108 {offsets = [11, 0], sizes = [1, 56], strides = [1, 1]} : vector<26x56xf32> to vector<1x56xf32>
    %152 = vector.extract_strided_slice %140 {offsets = [2, 0], sizes = [14, 56], strides = [1, 1]} : vector<18x56xf32> to vector<14x56xf32>
    %153 = vector.broadcast %151 : vector<1x56xf32> to vector<14x56xf32>
    %154 = arith.mulf %153, %152 : vector<14x56xf32>
    %155 = arith.addf %150, %154 : vector<14x56xf32>
    %156 = vector.extract_strided_slice %108 {offsets = [16, 0], sizes = [1, 56], strides = [1, 1]} : vector<26x56xf32> to vector<1x56xf32>
    %157 = vector.extract_strided_slice %140 {offsets = [3, 0], sizes = [14, 56], strides = [1, 1]} : vector<18x56xf32> to vector<14x56xf32>
    %158 = vector.broadcast %156 : vector<1x56xf32> to vector<14x56xf32>
    %159 = arith.mulf %158, %157 : vector<14x56xf32>
    %160 = arith.addf %155, %159 : vector<14x56xf32>
    %161 = vector.extract_strided_slice %108 {offsets = [21, 0], sizes = [1, 56], strides = [1, 1]} : vector<26x56xf32> to vector<1x56xf32>
    %162 = vector.extract_strided_slice %140 {offsets = [4, 0], sizes = [14, 56], strides = [1, 1]} : vector<18x56xf32> to vector<14x56xf32>
    %163 = vector.broadcast %161 : vector<1x56xf32> to vector<14x56xf32>
    %164 = arith.mulf %163, %162 : vector<14x56xf32>
    %165 = arith.addf %160, %164 : vector<14x56xf32>
    %c0_34 = arith.constant 0 : index
    %c2 = arith.constant 2 : index
    %166 = vector.load %arg5[%c0_34, %c2] : memref<18x18xf32, #tpu.memory_space<vmem>>, vector<18x14xf32>
    %167 = tpu.concatenate %166, %166, %166, %166 in 1 : vector<18x14xf32>, vector<18x14xf32>, vector<18x14xf32>, vector<18x14xf32> -> vector<18x56xf32>
    %168 = vector.extract_strided_slice %108 {offsets = [2, 0], sizes = [1, 56], strides = [1, 1]} : vector<26x56xf32> to vector<1x56xf32>
    %169 = vector.extract_strided_slice %167 {offsets = [0, 0], sizes = [14, 56], strides = [1, 1]} : vector<18x56xf32> to vector<14x56xf32>
    %170 = vector.broadcast %168 : vector<1x56xf32> to vector<14x56xf32>
    %171 = arith.mulf %170, %169 : vector<14x56xf32>
    %172 = arith.addf %165, %171 : vector<14x56xf32>
    %173 = vector.extract_strided_slice %108 {offsets = [7, 0], sizes = [1, 56], strides = [1, 1]} : vector<26x56xf32> to vector<1x56xf32>
    %174 = vector.extract_strided_slice %167 {offsets = [1, 0], sizes = [14, 56], strides = [1, 1]} : vector<18x56xf32> to vector<14x56xf32>
    %175 = vector.broadcast %173 : vector<1x56xf32> to vector<14x56xf32>
    %176 = arith.mulf %175, %174 : vector<14x56xf32>
    %177 = arith.addf %172, %176 : vector<14x56xf32>
    %178 = vector.extract_strided_slice %108 {offsets = [12, 0], sizes = [1, 56], strides = [1, 1]} : vector<26x56xf32> to vector<1x56xf32>
    %179 = vector.extract_strided_slice %167 {offsets = [2, 0], sizes = [14, 56], strides = [1, 1]} : vector<18x56xf32> to vector<14x56xf32>
    %180 = vector.broadcast %178 : vector<1x56xf32> to vector<14x56xf32>
    %181 = arith.mulf %180, %179 : vector<14x56xf32>
    %182 = arith.addf %177, %181 : vector<14x56xf32>
    %183 = vector.extract_strided_slice %108 {offsets = [17, 0], sizes = [1, 56], strides = [1, 1]} : vector<26x56xf32> to vector<1x56xf32>
    %184 = vector.extract_strided_slice %167 {offsets = [3, 0], sizes = [14, 56], strides = [1, 1]} : vector<18x56xf32> to vector<14x56xf32>
    %185 = vector.broadcast %183 : vector<1x56xf32> to vector<14x56xf32>
    %186 = arith.mulf %185, %184 : vector<14x56xf32>
    %187 = arith.addf %182, %186 : vector<14x56xf32>
    %188 = vector.extract_strided_slice %108 {offsets = [22, 0], sizes = [1, 56], strides = [1, 1]} : vector<26x56xf32> to vector<1x56xf32>
    %189 = vector.extract_strided_slice %167 {offsets = [4, 0], sizes = [14, 56], strides = [1, 1]} : vector<18x56xf32> to vector<14x56xf32>
    %190 = vector.broadcast %188 : vector<1x56xf32> to vector<14x56xf32>
    %191 = arith.mulf %190, %189 : vector<14x56xf32>
    %192 = arith.addf %187, %191 : vector<14x56xf32>
    %c0_35 = arith.constant 0 : index
    %c3 = arith.constant 3 : index
    %193 = vector.load %arg5[%c0_35, %c3] : memref<18x18xf32, #tpu.memory_space<vmem>>, vector<18x14xf32>
    %194 = tpu.concatenate %193, %193, %193, %193 in 1 : vector<18x14xf32>, vector<18x14xf32>, vector<18x14xf32>, vector<18x14xf32> -> vector<18x56xf32>
    %195 = vector.extract_strided_slice %108 {offsets = [3, 0], sizes = [1, 56], strides = [1, 1]} : vector<26x56xf32> to vector<1x56xf32>
    %196 = vector.extract_strided_slice %194 {offsets = [0, 0], sizes = [14, 56], strides = [1, 1]} : vector<18x56xf32> to vector<14x56xf32>
    %197 = vector.broadcast %195 : vector<1x56xf32> to vector<14x56xf32>
    %198 = arith.mulf %197, %196 : vector<14x56xf32>
    %199 = arith.addf %192, %198 : vector<14x56xf32>
    %200 = vector.extract_strided_slice %108 {offsets = [8, 0], sizes = [1, 56], strides = [1, 1]} : vector<26x56xf32> to vector<1x56xf32>
    %201 = vector.extract_strided_slice %194 {offsets = [1, 0], sizes = [14, 56], strides = [1, 1]} : vector<18x56xf32> to vector<14x56xf32>
    %202 = vector.broadcast %200 : vector<1x56xf32> to vector<14x56xf32>
    %203 = arith.mulf %202, %201 : vector<14x56xf32>
    %204 = arith.addf %199, %203 : vector<14x56xf32>
    %205 = vector.extract_strided_slice %108 {offsets = [13, 0], sizes = [1, 56], strides = [1, 1]} : vector<26x56xf32> to vector<1x56xf32>
    %206 = vector.extract_strided_slice %194 {offsets = [2, 0], sizes = [14, 56], strides = [1, 1]} : vector<18x56xf32> to vector<14x56xf32>
    %207 = vector.broadcast %205 : vector<1x56xf32> to vector<14x56xf32>
    %208 = arith.mulf %207, %206 : vector<14x56xf32>
    %209 = arith.addf %204, %208 : vector<14x56xf32>
    %210 = vector.extract_strided_slice %108 {offsets = [18, 0], sizes = [1, 56], strides = [1, 1]} : vector<26x56xf32> to vector<1x56xf32>
    %211 = vector.extract_strided_slice %194 {offsets = [3, 0], sizes = [14, 56], strides = [1, 1]} : vector<18x56xf32> to vector<14x56xf32>
    %212 = vector.broadcast %210 : vector<1x56xf32> to vector<14x56xf32>
    %213 = arith.mulf %212, %211 : vector<14x56xf32>
    %214 = arith.addf %209, %213 : vector<14x56xf32>
    %215 = vector.extract_strided_slice %108 {offsets = [23, 0], sizes = [1, 56], strides = [1, 1]} : vector<26x56xf32> to vector<1x56xf32>
    %216 = vector.extract_strided_slice %194 {offsets = [4, 0], sizes = [14, 56], strides = [1, 1]} : vector<18x56xf32> to vector<14x56xf32>
    %217 = vector.broadcast %215 : vector<1x56xf32> to vector<14x56xf32>
    %218 = arith.mulf %217, %216 : vector<14x56xf32>
    %219 = arith.addf %214, %218 : vector<14x56xf32>
    %c0_36 = arith.constant 0 : index
    %c4_37 = arith.constant 4 : index
    %220 = vector.load %arg5[%c0_36, %c4_37] : memref<18x18xf32, #tpu.memory_space<vmem>>, vector<18x14xf32>
    %221 = tpu.concatenate %220, %220, %220, %220 in 1 : vector<18x14xf32>, vector<18x14xf32>, vector<18x14xf32>, vector<18x14xf32> -> vector<18x56xf32>
    %222 = vector.extract_strided_slice %108 {offsets = [4, 0], sizes = [1, 56], strides = [1, 1]} : vector<26x56xf32> to vector<1x56xf32>
    %223 = vector.extract_strided_slice %221 {offsets = [0, 0], sizes = [14, 56], strides = [1, 1]} : vector<18x56xf32> to vector<14x56xf32>
    %224 = vector.broadcast %222 : vector<1x56xf32> to vector<14x56xf32>
    %225 = arith.mulf %224, %223 : vector<14x56xf32>
    %226 = arith.addf %219, %225 : vector<14x56xf32>
    %227 = vector.extract_strided_slice %108 {offsets = [9, 0], sizes = [1, 56], strides = [1, 1]} : vector<26x56xf32> to vector<1x56xf32>
    %228 = vector.extract_strided_slice %221 {offsets = [1, 0], sizes = [14, 56], strides = [1, 1]} : vector<18x56xf32> to vector<14x56xf32>
    %229 = vector.broadcast %227 : vector<1x56xf32> to vector<14x56xf32>
    %230 = arith.mulf %229, %228 : vector<14x56xf32>
    %231 = arith.addf %226, %230 : vector<14x56xf32>
    %232 = vector.extract_strided_slice %108 {offsets = [14, 0], sizes = [1, 56], strides = [1, 1]} : vector<26x56xf32> to vector<1x56xf32>
    %233 = vector.extract_strided_slice %221 {offsets = [2, 0], sizes = [14, 56], strides = [1, 1]} : vector<18x56xf32> to vector<14x56xf32>
    %234 = vector.broadcast %232 : vector<1x56xf32> to vector<14x56xf32>
    %235 = arith.mulf %234, %233 : vector<14x56xf32>
    %236 = arith.addf %231, %235 : vector<14x56xf32>
    %237 = vector.extract_strided_slice %108 {offsets = [19, 0], sizes = [1, 56], strides = [1, 1]} : vector<26x56xf32> to vector<1x56xf32>
    %238 = vector.extract_strided_slice %221 {offsets = [3, 0], sizes = [14, 56], strides = [1, 1]} : vector<18x56xf32> to vector<14x56xf32>
    %239 = vector.broadcast %237 : vector<1x56xf32> to vector<14x56xf32>
    %240 = arith.mulf %239, %238 : vector<14x56xf32>
    %241 = arith.addf %236, %240 : vector<14x56xf32>
    %242 = vector.extract_strided_slice %108 {offsets = [24, 0], sizes = [1, 56], strides = [1, 1]} : vector<26x56xf32> to vector<1x56xf32>
    %243 = vector.extract_strided_slice %221 {offsets = [4, 0], sizes = [14, 56], strides = [1, 1]} : vector<18x56xf32> to vector<14x56xf32>
    %244 = vector.broadcast %242 : vector<1x56xf32> to vector<14x56xf32>
    %245 = arith.mulf %244, %243 : vector<14x56xf32>
    %246 = arith.addf %241, %245 : vector<14x56xf32>
    %c0_38 = arith.constant 0 : index
    %c0_39 = arith.constant 0 : index
    %247 = vector.load %arg3[%c0_38, %c0_39] : memref<14x56xf32, #tpu.memory_space<vmem>>, vector<14x56xf32>
    tpu.vector_store %arg3[%c0_38, %c0_39], %246 {strides = array<i32>} : memref<14x56xf32, #tpu.memory_space<vmem>>, vector<14x56xf32>,
    %c0_40 = arith.constant 0 : index
    %c0_41 = arith.constant 0 : index
    %248 = vector.load %arg2[%c0_40, %c0_41] : memref<26x128xf32, #tpu.memory_space<vmem>>, vector<26x128xf32>
    %249 = vector.extract_strided_slice %248 {offsets = [25, 0], sizes = [1, 128], strides = [1, 1]} : vector<26x128xf32> to vector<1x128xf32>
    %250 = vector.shape_cast %249 : vector<1x128xf32> to vector<1x128xf32>
    %251 = vector.broadcast %250 : vector<1x128xf32> to vector<50x128xf32>
    %c0_42 = arith.constant 0 : index
    %c0_43 = arith.constant 0 : index
    %252 = vector.load %arg6[%c0_42, %c0_43] : memref<54x36xf32, #tpu.memory_space<vmem>>, vector<54x32xf32>
    %253 = tpu.concatenate %252, %252, %252, %252 in 1 : vector<54x32xf32>, vector<54x32xf32>, vector<54x32xf32>, vector<54x32xf32> -> vector<54x128xf32>
    %254 = vector.extract_strided_slice %248 {offsets = [0, 0], sizes = [1, 128], strides = [1, 1]} : vector<26x128xf32> to vector<1x128xf32>
    %255 = vector.extract_strided_slice %253 {offsets = [0, 0], sizes = [50, 128], strides = [1, 1]} : vector<54x128xf32> to vector<50x128xf32>
    %256 = vector.broadcast %254 : vector<1x128xf32> to vector<50x128xf32>
    %257 = arith.mulf %256, %255 : vector<50x128xf32>
    %258 = arith.addf %251, %257 : vector<50x128xf32>
    %259 = vector.extract_strided_slice %248 {offsets = [5, 0], sizes = [1, 128], strides = [1, 1]} : vector<26x128xf32> to vector<1x128xf32>
    %260 = vector.extract_strided_slice %253 {offsets = [1, 0], sizes = [50, 128], strides = [1, 1]} : vector<54x128xf32> to vector<50x128xf32>
    %261 = vector.broadcast %259 : vector<1x128xf32> to vector<50x128xf32>
    %262 = arith.mulf %261, %260 : vector<50x128xf32>
    %263 = arith.addf %258, %262 : vector<50x128xf32>
    %264 = vector.extract_strided_slice %248 {offsets = [10, 0], sizes = [1, 128], strides = [1, 1]} : vector<26x128xf32> to vector<1x128xf32>
    %265 = vector.extract_strided_slice %253 {offsets = [2, 0], sizes = [50, 128], strides = [1, 1]} : vector<54x128xf32> to vector<50x128xf32>
    %266 = vector.broadcast %264 : vector<1x128xf32> to vector<50x128xf32>
    %267 = arith.mulf %266, %265 : vector<50x128xf32>
    %268 = arith.addf %263, %267 : vector<50x128xf32>
    %269 = vector.extract_strided_slice %248 {offsets = [15, 0], sizes = [1, 128], strides = [1, 1]} : vector<26x128xf32> to vector<1x128xf32>
    %270 = vector.extract_strided_slice %253 {offsets = [3, 0], sizes = [50, 128], strides = [1, 1]} : vector<54x128xf32> to vector<50x128xf32>
    %271 = vector.broadcast %269 : vector<1x128xf32> to vector<50x128xf32>
    %272 = arith.mulf %271, %270 : vector<50x128xf32>
    %273 = arith.addf %268, %272 : vector<50x128xf32>
    %274 = vector.extract_strided_slice %248 {offsets = [20, 0], sizes = [1, 128], strides = [1, 1]} : vector<26x128xf32> to vector<1x128xf32>
    %275 = vector.extract_strided_slice %253 {offsets = [4, 0], sizes = [50, 128], strides = [1, 1]} : vector<54x128xf32> to vector<50x128xf32>
    %276 = vector.broadcast %274 : vector<1x128xf32> to vector<50x128xf32>
    %277 = arith.mulf %276, %275 : vector<50x128xf32>
    %278 = arith.addf %273, %277 : vector<50x128xf32>
    %c0_44 = arith.constant 0 : index
    %c1_45 = arith.constant 1 : index
    %279 = vector.load %arg6[%c0_44, %c1_45] : memref<54x36xf32, #tpu.memory_space<vmem>>, vector<54x32xf32>
    %280 = tpu.concatenate %279, %279, %279, %279 in 1 : vector<54x32xf32>, vector<54x32xf32>, vector<54x32xf32>, vector<54x32xf32> -> vector<54x128xf32>
    %281 = vector.extract_strided_slice %248 {offsets = [1, 0], sizes = [1, 128], strides = [1, 1]} : vector<26x128xf32> to vector<1x128xf32>
    %282 = vector.extract_strided_slice %280 {offsets = [0, 0], sizes = [50, 128], strides = [1, 1]} : vector<54x128xf32> to vector<50x128xf32>
    %283 = vector.broadcast %281 : vector<1x128xf32> to vector<50x128xf32>
    %284 = arith.mulf %283, %282 : vector<50x128xf32>
    %285 = arith.addf %278, %284 : vector<50x128xf32>
    %286 = vector.extract_strided_slice %248 {offsets = [6, 0], sizes = [1, 128], strides = [1, 1]} : vector<26x128xf32> to vector<1x128xf32>
    %287 = vector.extract_strided_slice %280 {offsets = [1, 0], sizes = [50, 128], strides = [1, 1]} : vector<54x128xf32> to vector<50x128xf32>
    %288 = vector.broadcast %286 : vector<1x128xf32> to vector<50x128xf32>
    %289 = arith.mulf %288, %287 : vector<50x128xf32>
    %290 = arith.addf %285, %289 : vector<50x128xf32>
    %291 = vector.extract_strided_slice %248 {offsets = [11, 0], sizes = [1, 128], strides = [1, 1]} : vector<26x128xf32> to vector<1x128xf32>
    %292 = vector.extract_strided_slice %280 {offsets = [2, 0], sizes = [50, 128], strides = [1, 1]} : vector<54x128xf32> to vector<50x128xf32>
    %293 = vector.broadcast %291 : vector<1x128xf32> to vector<50x128xf32>
    %294 = arith.mulf %293, %292 : vector<50x128xf32>
    %295 = arith.addf %290, %294 : vector<50x128xf32>
    %296 = vector.extract_strided_slice %248 {offsets = [16, 0], sizes = [1, 128], strides = [1, 1]} : vector<26x128xf32> to vector<1x128xf32>
    %297 = vector.extract_strided_slice %280 {offsets = [3, 0], sizes = [50, 128], strides = [1, 1]} : vector<54x128xf32> to vector<50x128xf32>
    %298 = vector.broadcast %296 : vector<1x128xf32> to vector<50x128xf32>
    %299 = arith.mulf %298, %297 : vector<50x128xf32>
    %300 = arith.addf %295, %299 : vector<50x128xf32>
    %301 = vector.extract_strided_slice %248 {offsets = [21, 0], sizes = [1, 128], strides = [1, 1]} : vector<26x128xf32> to vector<1x128xf32>
    %302 = vector.extract_strided_slice %280 {offsets = [4, 0], sizes = [50, 128], strides = [1, 1]} : vector<54x128xf32> to vector<50x128xf32>
    %303 = vector.broadcast %301 : vector<1x128xf32> to vector<50x128xf32>
    %304 = arith.mulf %303, %302 : vector<50x128xf32>
    %305 = arith.addf %300, %304 : vector<50x128xf32>
    %c0_46 = arith.constant 0 : index
    %c2_47 = arith.constant 2 : index
    %306 = vector.load %arg6[%c0_46, %c2_47] : memref<54x36xf32, #tpu.memory_space<vmem>>, vector<54x32xf32>
    %307 = tpu.concatenate %306, %306, %306, %306 in 1 : vector<54x32xf32>, vector<54x32xf32>, vector<54x32xf32>, vector<54x32xf32> -> vector<54x128xf32>
    %308 = vector.extract_strided_slice %248 {offsets = [2, 0], sizes = [1, 128], strides = [1, 1]} : vector<26x128xf32> to vector<1x128xf32>
    %309 = vector.extract_strided_slice %307 {offsets = [0, 0], sizes = [50, 128], strides = [1, 1]} : vector<54x128xf32> to vector<50x128xf32>
    %310 = vector.broadcast %308 : vector<1x128xf32> to vector<50x128xf32>
    %311 = arith.mulf %310, %309 : vector<50x128xf32>
    %312 = arith.addf %305, %311 : vector<50x128xf32>
    %313 = vector.extract_strided_slice %248 {offsets = [7, 0], sizes = [1, 128], strides = [1, 1]} : vector<26x128xf32> to vector<1x128xf32>
    %314 = vector.extract_strided_slice %307 {offsets = [1, 0], sizes = [50, 128], strides = [1, 1]} : vector<54x128xf32> to vector<50x128xf32>
    %315 = vector.broadcast %313 : vector<1x128xf32> to vector<50x128xf32>
    %316 = arith.mulf %315, %314 : vector<50x128xf32>
    %317 = arith.addf %312, %316 : vector<50x128xf32>
    %318 = vector.extract_strided_slice %248 {offsets = [12, 0], sizes = [1, 128], strides = [1, 1]} : vector<26x128xf32> to vector<1x128xf32>
    %319 = vector.extract_strided_slice %307 {offsets = [2, 0], sizes = [50, 128], strides = [1, 1]} : vector<54x128xf32> to vector<50x128xf32>
    %320 = vector.broadcast %318 : vector<1x128xf32> to vector<50x128xf32>
    %321 = arith.mulf %320, %319 : vector<50x128xf32>
    %322 = arith.addf %317, %321 : vector<50x128xf32>
    %323 = vector.extract_strided_slice %248 {offsets = [17, 0], sizes = [1, 128], strides = [1, 1]} : vector<26x128xf32> to vector<1x128xf32>
    %324 = vector.extract_strided_slice %307 {offsets = [3, 0], sizes = [50, 128], strides = [1, 1]} : vector<54x128xf32> to vector<50x128xf32>
    %325 = vector.broadcast %323 : vector<1x128xf32> to vector<50x128xf32>
    %326 = arith.mulf %325, %324 : vector<50x128xf32>
    %327 = arith.addf %322, %326 : vector<50x128xf32>
    %328 = vector.extract_strided_slice %248 {offsets = [22, 0], sizes = [1, 128], strides = [1, 1]} : vector<26x128xf32> to vector<1x128xf32>
    %329 = vector.extract_strided_slice %307 {offsets = [4, 0], sizes = [50, 128], strides = [1, 1]} : vector<54x128xf32> to vector<50x128xf32>
    %330 = vector.broadcast %328 : vector<1x128xf32> to vector<50x128xf32>
    %331 = arith.mulf %330, %329 : vector<50x128xf32>
    %332 = arith.addf %327, %331 : vector<50x128xf32>
    %c0_48 = arith.constant 0 : index
    %c3_49 = arith.constant 3 : index
    %333 = vector.load %arg6[%c0_48, %c3_49] : memref<54x36xf32, #tpu.memory_space<vmem>>, vector<54x32xf32>
    %334 = tpu.concatenate %333, %333, %333, %333 in 1 : vector<54x32xf32>, vector<54x32xf32>, vector<54x32xf32>, vector<54x32xf32> -> vector<54x128xf32>
    %335 = vector.extract_strided_slice %248 {offsets = [3, 0], sizes = [1, 128], strides = [1, 1]} : vector<26x128xf32> to vector<1x128xf32>
    %336 = vector.extract_strided_slice %334 {offsets = [0, 0], sizes = [50, 128], strides = [1, 1]} : vector<54x128xf32> to vector<50x128xf32>
    %337 = vector.broadcast %335 : vector<1x128xf32> to vector<50x128xf32>
    %338 = arith.mulf %337, %336 : vector<50x128xf32>
    %339 = arith.addf %332, %338 : vector<50x128xf32>
    %340 = vector.extract_strided_slice %248 {offsets = [8, 0], sizes = [1, 128], strides = [1, 1]} : vector<26x128xf32> to vector<1x128xf32>
    %341 = vector.extract_strided_slice %334 {offsets = [1, 0], sizes = [50, 128], strides = [1, 1]} : vector<54x128xf32> to vector<50x128xf32>
    %342 = vector.broadcast %340 : vector<1x128xf32> to vector<50x128xf32>
    %343 = arith.mulf %342, %341 : vector<50x128xf32>
    %344 = arith.addf %339, %343 : vector<50x128xf32>
    %345 = vector.extract_strided_slice %248 {offsets = [13, 0], sizes = [1, 128], strides = [1, 1]} : vector<26x128xf32> to vector<1x128xf32>
    %346 = vector.extract_strided_slice %334 {offsets = [2, 0], sizes = [50, 128], strides = [1, 1]} : vector<54x128xf32> to vector<50x128xf32>
    %347 = vector.broadcast %345 : vector<1x128xf32> to vector<50x128xf32>
    %348 = arith.mulf %347, %346 : vector<50x128xf32>
    %349 = arith.addf %344, %348 : vector<50x128xf32>
    %350 = vector.extract_strided_slice %248 {offsets = [18, 0], sizes = [1, 128], strides = [1, 1]} : vector<26x128xf32> to vector<1x128xf32>
    %351 = vector.extract_strided_slice %334 {offsets = [3, 0], sizes = [50, 128], strides = [1, 1]} : vector<54x128xf32> to vector<50x128xf32>
    %352 = vector.broadcast %350 : vector<1x128xf32> to vector<50x128xf32>
    %353 = arith.mulf %352, %351 : vector<50x128xf32>
    %354 = arith.addf %349, %353 : vector<50x128xf32>
    %355 = vector.extract_strided_slice %248 {offsets = [23, 0], sizes = [1, 128], strides = [1, 1]} : vector<26x128xf32> to vector<1x128xf32>
    %356 = vector.extract_strided_slice %334 {offsets = [4, 0], sizes = [50, 128], strides = [1, 1]} : vector<54x128xf32> to vector<50x128xf32>
    %357 = vector.broadcast %355 : vector<1x128xf32> to vector<50x128xf32>
    %358 = arith.mulf %357, %356 : vector<50x128xf32>
    %359 = arith.addf %354, %358 : vector<50x128xf32>
    %c0_50 = arith.constant 0 : index
    %c4_51 = arith.constant 4 : index
    %360 = vector.load %arg6[%c0_50, %c4_51] : memref<54x36xf32, #tpu.memory_space<vmem>>, vector<54x32xf32>
    %361 = tpu.concatenate %360, %360, %360, %360 in 1 : vector<54x32xf32>, vector<54x32xf32>, vector<54x32xf32>, vector<54x32xf32> -> vector<54x128xf32>
    %362 = vector.extract_strided_slice %248 {offsets = [4, 0], sizes = [1, 128], strides = [1, 1]} : vector<26x128xf32> to vector<1x128xf32>
    %363 = vector.extract_strided_slice %361 {offsets = [0, 0], sizes = [50, 128], strides = [1, 1]} : vector<54x128xf32> to vector<50x128xf32>
    %364 = vector.broadcast %362 : vector<1x128xf32> to vector<50x128xf32>
    %365 = arith.mulf %364, %363 : vector<50x128xf32>
    %366 = arith.addf %359, %365 : vector<50x128xf32>
    %367 = vector.extract_strided_slice %248 {offsets = [9, 0], sizes = [1, 128], strides = [1, 1]} : vector<26x128xf32> to vector<1x128xf32>
    %368 = vector.extract_strided_slice %361 {offsets = [1, 0], sizes = [50, 128], strides = [1, 1]} : vector<54x128xf32> to vector<50x128xf32>
    %369 = vector.broadcast %367 : vector<1x128xf32> to vector<50x128xf32>
    %370 = arith.mulf %369, %368 : vector<50x128xf32>
    %371 = arith.addf %366, %370 : vector<50x128xf32>
    %372 = vector.extract_strided_slice %248 {offsets = [14, 0], sizes = [1, 128], strides = [1, 1]} : vector<26x128xf32> to vector<1x128xf32>
    %373 = vector.extract_strided_slice %361 {offsets = [2, 0], sizes = [50, 128], strides = [1, 1]} : vector<54x128xf32> to vector<50x128xf32>
    %374 = vector.broadcast %372 : vector<1x128xf32> to vector<50x128xf32>
    %375 = arith.mulf %374, %373 : vector<50x128xf32>
    %376 = arith.addf %371, %375 : vector<50x128xf32>
    %377 = vector.extract_strided_slice %248 {offsets = [19, 0], sizes = [1, 128], strides = [1, 1]} : vector<26x128xf32> to vector<1x128xf32>
    %378 = vector.extract_strided_slice %361 {offsets = [3, 0], sizes = [50, 128], strides = [1, 1]} : vector<54x128xf32> to vector<50x128xf32>
    %379 = vector.broadcast %377 : vector<1x128xf32> to vector<50x128xf32>
    %380 = arith.mulf %379, %378 : vector<50x128xf32>
    %381 = arith.addf %376, %380 : vector<50x128xf32>
    %382 = vector.extract_strided_slice %248 {offsets = [24, 0], sizes = [1, 128], strides = [1, 1]} : vector<26x128xf32> to vector<1x128xf32>
    %383 = vector.extract_strided_slice %361 {offsets = [4, 0], sizes = [50, 128], strides = [1, 1]} : vector<54x128xf32> to vector<50x128xf32>
    %384 = vector.broadcast %382 : vector<1x128xf32> to vector<50x128xf32>
    %385 = arith.mulf %384, %383 : vector<50x128xf32>
    %386 = arith.addf %381, %385 : vector<50x128xf32>
    %c0_52 = arith.constant 0 : index
    %c0_53 = arith.constant 0 : index
    %387 = vector.load %arg4[%c0_52, %c0_53] : memref<50x128xf32, #tpu.memory_space<vmem>>, vector<50x128xf32>
    tpu.vector_store %arg4[%c0_52, %c0_53], %386 {strides = array<i32>} : memref<50x128xf32, #tpu.memory_space<vmem>>, vector<50x128xf32>,
    return
  }
}

</mosaic_0001>

<llo_original>
// kernel: squeeze.3
$region0: #{squeeze.3}
  %s0 = inlined_call_operand.vmem [shape: f32[1,4,5,5], index: 0, kind: input, shape index: {}]
  %s1 = inlined_call_operand.vmem [shape: f32[4,25], index: 1, kind: output, shape index: {}]
  $region1: #{squeeze.3} parent=0
    #allocation0 [shape = 'u8[4096]{0}', space=vmem, size = 0x1000, scoped, tag = 'scoped mem for output reshape']
    %v2 = vld [vmem:[%s0] ss:$8 sm:$0xf]
    %vm3 = vcmask 39936
    %4 = vst.msk [vmem:[#allocation0] sm:$0xf] %vm3, %v2
    %s5 = scalar_lea.vmem %s0, 4
    %v6 = vld [vmem:[%s5] ss:$8 sm:$0xf]
    %7 = vrot.lane.b32.xlu0 %v6, 20
    %v8 = vpop.permute.xlu0 %7
    %vm9 = vcmask 203936
    %10 = vst.msk [vmem:[#allocation0] sm:$0xf] %vm9, %v8
    %s11 = scalar_lea.vmem %s0, 3
    %v12 = vld [vmem:[%s11] ss:$8 sm:$0xf]
    %13 = vrot.lane.b32.xlu0 %v12, 15
    %v14 = vpop.permute.xlu0 %13
    %vm15 = vcmask 162936
    %16 = vst.msk [vmem:[#allocation0] sm:$0xf] %vm15, %v14
    %s17 = scalar_lea.vmem %s0, 2
    %v18 = vld [vmem:[%s17] ss:$8 sm:$0xf]
    %19 = vrot.lane.b32.xlu0 %v18, 10
    %v20 = vpop.permute.xlu0 %19
    %vm21 = vcmask 121936
    %22 = vst.msk [vmem:[#allocation0] sm:$0xf] %vm21, %v20
    %s23 = scalar_lea.vmem %s0, 1
    %v24 = vld [vmem:[%s23] ss:$8 sm:$0xf]
    %25 = vrot.lane.b32.xlu0 %v24, 5
    %v26 = vpop.permute.xlu0 %25
    %vm27 = vcmask 80936
    %28 = vst.msk [vmem:[#allocation0] sm:$0xf] %vm27, %v26
    %s30 = sshll.u32 1, 4
    %s31 = ssub.s32 %s30, 1
    %v33 = vld [vmem:[#allocation0] sm:%s31]
    %s34 = sshll.u32 1, 4
    %s35 = ssub.s32 %s34, 1
    %36 = vst [vmem:[%s1] sm:%s35] %v33

// kernel: model_forward.1
$region0: #{model_forward.1}
  #allocation0 [shape = 'u32[]', space=smem, size = 0x4, offset = 0x4, fixed_abs, tag = 'smem constant byte address 0x4 - core index']
  #allocation1 [shape = 'u32[144,128]{1,0:T(1,128)}', space=vmem, size = 0x12000, scoped, tag = 'internal scratch']
  #allocation2 [shape = 'f32[18,18]{1,0:T(8,128)}', space=vmem, size = 0x3000, scoped, tag = 'scratch operand']
  #allocation3 [shape = 'f32[54,36]{1,0:T(8,128)}', space=vmem, size = 0x7000, scoped, tag = 'scratch operand']
  %s0 = inlined_call_operand.vmem [shape: f32[10,10], index: 0, kind: input, shape index: {}]
  %s1 = inlined_call_operand.vmem [shape: f32[26,56], index: 1, kind: input, shape index: {}]
  %s2 = inlined_call_operand.vmem [shape: f32[26,128], index: 2, kind: input, shape index: {}]
  %s3 = inlined_call_operand.vmem [shape: f32[14,56], index: 3, kind: output, shape index: {0}]
  %s4 = inlined_call_operand.vmem [shape: f32[50,128], index: 4, kind: output, shape index: {1}]
  %5 = xla_tuple %s3, %s4
  %s6 = sld [smem:[#allocation0]]
  $region30: #{model_forward.1} parent=0
    _
  %s8 = ssub.s32 1, %s6
  %s9 = scalar_select 0, %s8, %s6
  // Predicated region
  $region2: #{model_forward.1} parent=0 // pred_check
    _
  $region3: #{model_forward.1} parent=0 // pred_check_branch
    %11 = sbr.rel (0) target = $region5
  $region4: #{model_forward.1} parent=0 // pred_region
    _
  $region5: #{model_forward.1} parent=0 // pred_fallthru
    _
  // Predicated region
  $region6: #{model_forward.1} parent=0 // pred_check
    _
  $region7: #{model_forward.1} parent=0 // pred_check_branch
    %13 = sbr.rel (0) target = $region9
  $region8: #{model_forward.1} parent=0 // pred_region
    _
  $region9: #{model_forward.1} parent=0 // pred_fallthru
    _
  // Predicated region
  $region10: #{model_forward.1} parent=0 // pred_check
    _
  $region11: #{model_forward.1} parent=0 // pred_check_branch
    %15 = sbr.rel (0) target = $region13
  $region12: #{model_forward.1} parent=0 // pred_region
    _
  $region13: #{model_forward.1} parent=0 // pred_fallthru
    _
  %v16 = vld [vmem:[%s0] sm:$0xff]
  %v17 = vld [vmem:[%s0 + $0x8] sm:$0x3]
  %vm18 = vcmask 146432
  %19 = vst.msk [vmem:[#allocation2] sm:$0xff] %vm18, 0.0
  %20 = vst.msk [vmem:[#allocation2 + $0x8] sm:$0xff] %vm18, 0.0
  %vm21 = vcmask 140288
  %22 = vst.msk [vmem:[#allocation2 + $0x10] sm:$0x3] %vm21, 0.0
  %25 = vrot.lane.b32.xlu0 %v16, 4
  %v26 = vpop.permute.xlu0 %25
  %27 = vrot.lane.b32.xlu0 %v17, 4
  %v28 = vpop.permute.xlu0 %27
  %vm31 = vcmask 113696
  %32 = vst.msk [vmem:[#allocation2 + $0x4] sm:$0xff] %vm31, %v26
  %vm33 = vcmask 107552
  %34 = vst.msk [vmem:[#allocation2 + $0xc] sm:$0x3] %vm33, %v28
  %v35 = vlaneseq
  %v36 = vand.u32 %v35, 127
  %vm37 = vcmp.eq.s32.totalorder %v36, 4
  %38 = vset.pattern.permute.xlu0 0
  %39 = vperm.xlu0 %38, %v16
  %v40 = vpop.permute.xlu0 %39
  %42 = vset.pattern.permute.xlu0 0
  %43 = vperm.xlu0 %42, %v17
  %v44 = vpop.permute.xlu0 %43
  %v46 = vsel %vm37, %v40, 0.0
  %v47 = vsel %vm37, %v44, 0.0
  %v48 = vadd.f32 %v46, 0.0
  %v49 = vadd.f32 %v47, 0.0
  %vm50 = vcmp.eq.s32.totalorder %v36, 7
  %51 = vset.pattern.permute.xlu0 1
  %52 = vperm.xlu0 %51, %v16
  %v53 = vpop.permute.xlu0 %52
  %55 = vset.pattern.permute.xlu0 1
  %56 = vperm.xlu0 %55, %v17
  %v57 = vpop.permute.xlu0 %56
  %v59 = vsel %vm50, %v53, 0.0
  %v60 = vsel %vm50, %v57, 0.0
  %v61 = vadd.f32 %v48, %v59
  %v62 = vadd.f32 %v49, %v60
  %vm63 = vcmp.eq.s32.totalorder %v36, 10
  %64 = vset.pattern.permute.xlu0 2
  %65 = vperm.xlu0 %64, %v16
  %v66 = vpop.permute.xlu0 %65
  %68 = vset.pattern.permute.xlu0 2
  %69 = vperm.xlu0 %68, %v17
  %v70 = vpop.permute.xlu0 %69
  %v72 = vsel %vm63, %v66, 0.0
  %v73 = vsel %vm63, %v70, 0.0
  %v74 = vadd.f32 %v61, %v72
  %v75 = vadd.f32 %v62, %v73
  %vm76 = vcmp.eq.s32.totalorder %v36, 13
  %77 = vset.pattern.permute.xlu0 3
  %78 = vperm.xlu0 %77, %v16
  %v79 = vpop.permute.xlu0 %78
  %81 = vset.pattern.permute.xlu0 3
  %82 = vperm.xlu0 %81, %v17
  %v83 = vpop.permute.xlu0 %82
  %v85 = vsel %vm76, %v79, 0.0
  %v86 = vsel %vm76, %v83, 0.0
  %v87 = vadd.f32 %v74, %v85
  %v88 = vadd.f32 %v75, %v86
  %vm89 = vcmp.eq.s32.totalorder %v36, 16
  %90 = vset.pattern.permute.xlu0 4
  %91 = vperm.xlu0 %90, %v16
  %v92 = vpop.permute.xlu0 %91
  %94 = vset.pattern.permute.xlu0 4
  %95 = vperm.xlu0 %94, %v17
  %v96 = vpop.permute.xlu0 %95
  %v98 = vsel %vm89, %v92, 0.0
  %v99 = vsel %vm89, %v96, 0.0
  %v100 = vadd.f32 %v87, %v98
  %v101 = vadd.f32 %v88, %v99
  %vm102 = vcmp.eq.s32.totalorder %v36, 19
  %103 = vset.pattern.permute.xlu0 5
  %104 = vperm.xlu0 %103, %v16
  %v105 = vpop.permute.xlu0 %104
  %107 = vset.pattern.permute.xlu0 5
  %108 = vperm.xlu0 %107, %v17
  %v109 = vpop.permute.xlu0 %108
  %v111 = vsel %vm102, %v105, 0.0
  %v112 = vsel %vm102, %v109, 0.0
  %v113 = vadd.f32 %v100, %v111
  %v114 = vadd.f32 %v101, %v112
  %vm115 = vcmp.eq.s32.totalorder %v36, 22
  %116 = vset.pattern.permute.xlu0 6
  %117 = vperm.xlu0 %116, %v16
  %v118 = vpop.permute.xlu0 %117
  %120 = vset.pattern.permute.xlu0 6
  %121 = vperm.xlu0 %120, %v17
  %v122 = vpop.permute.xlu0 %121
  %v124 = vsel %vm115, %v118, 0.0
  %v125 = vsel %vm115, %v122, 0.0
  %v126 = vadd.f32 %v113, %v124
  %v127 = vadd.f32 %v114, %v125
  %vm128 = vcmp.eq.s32.totalorder %v36, 25
  %129 = vset.pattern.permute.xlu0 7
  %130 = vperm.xlu0 %129, %v16
  %v131 = vpop.permute.xlu0 %130
  %133 = vset.pattern.permute.xlu0 7
  %134 = vperm.xlu0 %133, %v17
  %v135 = vpop.permute.xlu0 %134
  %v137 = vsel %vm128, %v131, 0.0
  %v138 = vsel %vm128, %v135, 0.0
  %v139 = vadd.f32 %v126, %v137
  %v140 = vadd.f32 %v127, %v138
  %vm141 = vcmp.eq.s32.totalorder %v36, 28
  %142 = vset.pattern.permute.xlu0 8
  %143 = vperm.xlu0 %142, %v16
  %v144 = vpop.permute.xlu0 %143
  %146 = vset.pattern.permute.xlu0 8
  %147 = vperm.xlu0 %146, %v17
  %v148 = vpop.permute.xlu0 %147
  %v150 = vsel %vm141, %v144, 0.0
  %v151 = vsel %vm141, %v148, 0.0
  %v152 = vadd.f32 %v139, %v150
  %v153 = vadd.f32 %v140, %v151
  %vm154 = vcmp.eq.s32.totalorder %v36, 31
  %155 = vset.pattern.permute.xlu0 9
  %156 = vperm.xlu0 %155, %v16
  %v157 = vpop.permute.xlu0 %156
  %159 = vset.pattern.permute.xlu0 9
  %160 = vperm.xlu0 %159, %v17
  %v161 = vpop.permute.xlu0 %160
  %v163 = vsel %vm154, %v157, 0.0
  %v164 = vsel %vm154, %v161, 0.0
  %v165 = vadd.f32 %v152, %v163
  %v166 = vadd.f32 %v153, %v164
  %vm167 = vcmask 293888
  %168 = vst.msk [vmem:[#allocation3] sm:$0xff] %vm167, 0.0
  %169 = vst.msk [vmem:[#allocation3 + $0x8] sm:$0xff] %vm167, 0.0
  %170 = vst.msk [vmem:[#allocation3 + $0x10] sm:$0xff] %vm167, 0.0
  %171 = vst.msk [vmem:[#allocation3 + $0x18] sm:$0xff] %vm167, 0.0
  %172 = vst.msk [vmem:[#allocation3 + $0x20] sm:$0xff] %vm167, 0.0
  %173 = vst.msk [vmem:[#allocation3 + $0x28] sm:$0xff] %vm167, 0.0
  %vm174 = vcmask 291840
  %175 = vst.msk [vmem:[#allocation3 + $0x30] sm:$0x3f] %vm174, 0.0
  %vm176 = vcmask 286720
  %177 = vst.msk [vmem:[#allocation3 + $0x4] sm:$0x1] %vm176, %v165
  %vm178 = vcmask 287745
  %179 = vst.msk [vmem:[#allocation3 + $0x8] sm:$0x2] %vm178, %v165
  %vm180 = vcmask 288770
  %181 = vst.msk [vmem:[#allocation3 + $0xc] sm:$0x4] %vm180, %v165
  %vm182 = vcmask 289795
  %183 = vst.msk [vmem:[#allocation3 + $0x10] sm:$0x8] %vm182, %v165
  %vm184 = vcmask 290820
  %185 = vst.msk [vmem:[#allocation3 + $0x14] sm:$0x10] %vm184, %v165
  %vm186 = vcmask 291845
  %187 = vst.msk [vmem:[#allocation3 + $0x18] sm:$0x20] %vm186, %v165
  %vm188 = vcmask 292870
  %189 = vst.msk [vmem:[#allocation3 + $0x1c] sm:$0x40] %vm188, %v165
  %vm190 = vcmask 293895
  %191 = vst.msk [vmem:[#allocation3 + $0x20] sm:$0x80] %vm190, %v165
  %192 = vst.msk [vmem:[#allocation3 + $0x2c] sm:$0x1] %vm176, %v166
  %193 = vst.msk [vmem:[#allocation3 + $0x30] sm:$0x2] %vm178, %v166
  %v194 = vld [vmem:[%s1] sm:$0xff]
  %v195 = vld [vmem:[%s1 + $0x8] sm:$0xff]
  %v196 = vld [vmem:[%s1 + $0x10] sm:$0xff]
  %v197 = vld [vmem:[%s1 + $0x18] sm:$0x3]
  %v198 = vlaneseq
  %v199 = vshrl.u32 %v198, 7
  %v200 = vsub.s32 1, %v199
  %v201 = vrot.slane %v197, %v200
  %v202 = vld [vmem:[#allocation2] sm:$0xff]
  %v203 = vld [vmem:[#allocation2 + $0x8] sm:$0xff]
  %v204 = vld [vmem:[#allocation2 + $0x10] sm:$0x3]
  %208 = vrot.lane.b32.xlu0 %v202, 14
  %v209 = vpop.permute.xlu0 %208
  %210 = vrot.lane.b32.xlu0 %v203, 14
  %v211 = vpop.permute.xlu0 %210
  %212 = vrot.lane.b32.xlu0 %v204, 14
  %v213 = vpop.permute.xlu0 %212
  %217 = vrot.lane.b32.xlu0 %v202, 28
  %v218 = vpop.permute.xlu0 %217
  %219 = vrot.lane.b32.xlu0 %v203, 28
  %v220 = vpop.permute.xlu0 %219
  %221 = vrot.lane.b32.xlu0 %v204, 28
  %v222 = vpop.permute.xlu0 %221
  %226 = vrot.lane.b32.xlu0 %v202, 42
  %v227 = vpop.permute.xlu0 %226
  %228 = vrot.lane.b32.xlu0 %v203, 42
  %v229 = vpop.permute.xlu0 %228
  %230 = vrot.lane.b32.xlu0 %v204, 42
  %v231 = vpop.permute.xlu0 %230
  %vm235 = vcmask 113664
  %v236 = vsel %vm235, %v202, %v209
  %v237 = vsel %vm235, %v203, %v211
  %v238 = vsel %vm235, %v204, %v213
  %vm239 = vcmask 228352
  %v240 = vsel %vm239, %v236, %v218
  %v241 = vsel %vm239, %v237, %v220
  %v242 = vsel %vm239, %v238, %v222
  %vm243 = vcmask 343040
  %v244 = vsel %vm243, %v240, %v227
  %v245 = vsel %vm243, %v241, %v229
  %v246 = vsel %vm243, %v242, %v231
  %v247 = vlaneseq
  %v248 = vshrl.u32 %v247, 7
  %v249 = vsub.s32 0, %v248
  %v250 = vrot.slane %v194, %v249
  %v251 = vmul.f32 %v250, %v244
  %v252 = vmul.f32 %v250, %v245
  %v253 = vadd.f32 %v201, %v251
  %v254 = vadd.f32 %v201, %v252
  %v255 = vlaneseq
  %v256 = vshrl.u32 %v255, 7
  %v257 = vsub.s32 5, %v256
  %v258 = vrot.slane %v194, %v257
  %v259 = vmul.f32 %v258, %v244
  %v260 = vmul.f32 %v258, %v245
  %vm263 = vcmask 1046528
  %v264 = vrot.slane %v259, 1
  %v265 = vrot.slane %v260, 1
  %v266 = vsel %vm263, %v264, %v265
  %v269 = vadd.f32 %v253, %v266
  %v270 = vadd.f32 %v254, %v265
  %v271 = vlaneseq
  %v272 = vshrl.u32 %v271, 7
  %v273 = vsub.s32 2, %v272
  %v274 = vrot.slane %v195, %v273
  %v275 = vmul.f32 %v274, %v244
  %v276 = vmul.f32 %v274, %v245
  %vm279 = vcmask 1045504
  %v280 = vrot.slane %v275, 2
  %v281 = vrot.slane %v276, 2
  %v282 = vsel %vm279, %v280, %v281
  %v285 = vadd.f32 %v269, %v282
  %v286 = vadd.f32 %v270, %v281
  %v287 = vlaneseq
  %v288 = vshrl.u32 %v287, 7
  %v289 = vsub.s32 7, %v288
  %v290 = vrot.slane %v195, %v289
  %v291 = vmul.f32 %v290, %v244
  %v292 = vmul.f32 %v290, %v245
  %v293 = vmul.f32 %v290, %v246
  %vm297 = vcmask 1044480
  %v298 = vrot.slane %v291, 3
  %v299 = vrot.slane %v292, 3
  %v300 = vsel %vm297, %v298, %v299
  %v301 = vrot.slane %v293, 3
  %v302 = vsel %vm297, %v299, %v301
  %v305 = vadd.f32 %v285, %v300
  %v306 = vadd.f32 %v286, %v302
  %v307 = vlaneseq
  %v308 = vshrl.u32 %v307, 7
  %v309 = vsub.s32 4, %v308
  %v310 = vrot.slane %v196, %v309
  %v311 = vmul.f32 %v310, %v244
  %v312 = vmul.f32 %v310, %v245
  %v313 = vmul.f32 %v310, %v246
  %vm317 = vcmask 1043456
  %v318 = vrot.slane %v311, 4
  %v319 = vrot.slane %v312, 4
  %v320 = vsel %vm317, %v318, %v319
  %v321 = vrot.slane %v313, 4
  %v322 = vsel %vm317, %v319, %v321
  %v325 = vadd.f32 %v305, %v320
  %v326 = vadd.f32 %v306, %v322
  %327 = vrot.lane.b32.xlu0 %v202, 127
  %v328 = vpop.permute.xlu0 %327
  %329 = vrot.lane.b32.xlu0 %v203, 127
  %v330 = vpop.permute.xlu0 %329
  %331 = vrot.lane.b32.xlu0 %v204, 127
  %v332 = vpop.permute.xlu0 %331
  %336 = vrot.lane.b32.xlu0 %v202, 13
  %v337 = vpop.permute.xlu0 %336
  %338 = vrot.lane.b32.xlu0 %v203, 13
  %v339 = vpop.permute.xlu0 %338
  %340 = vrot.lane.b32.xlu0 %v204, 13
  %v341 = vpop.permute.xlu0 %340
  %345 = vrot.lane.b32.xlu0 %v202, 27
  %v346 = vpop.permute.xlu0 %345
  %347 = vrot.lane.b32.xlu0 %v203, 27
  %v348 = vpop.permute.xlu0 %347
  %349 = vrot.lane.b32.xlu0 %v204, 27
  %v350 = vpop.permute.xlu0 %349
  %354 = vrot.lane.b32.xlu0 %v202, 41
  %v355 = vpop.permute.xlu0 %354
  %356 = vrot.lane.b32.xlu0 %v203, 41
  %v357 = vpop.permute.xlu0 %356
  %358 = vrot.lane.b32.xlu0 %v204, 41
  %v359 = vpop.permute.xlu0 %358
  %v363 = vsel %vm235, %v328, %v337
  %v364 = vsel %vm235, %v330, %v339
  %v365 = vsel %vm235, %v332, %v341
  %v366 = vsel %vm239, %v363, %v346
  %v367 = vsel %vm239, %v364, %v348
  %v368 = vsel %vm239, %v365, %v350
  %v369 = vsel %vm243, %v366, %v355
  %v370 = vsel %vm243, %v367, %v357
  %v371 = vsel %vm243, %v368, %v359
  %v372 = vlaneseq
  %v373 = vshrl.u32 %v372, 7
  %v374 = vsub.s32 1, %v373
  %v375 = vrot.slane %v194, %v374
  %v376 = vmul.f32 %v375, %v369
  %v377 = vmul.f32 %v375, %v370
  %v378 = vadd.f32 %v325, %v376
  %v379 = vadd.f32 %v326, %v377
  %v380 = vlaneseq
  %v381 = vshrl.u32 %v380, 7
  %v382 = vsub.s32 6, %v381
  %v383 = vrot.slane %v194, %v382
  %v384 = vmul.f32 %v383, %v369
  %v385 = vmul.f32 %v383, %v370
  %v388 = vrot.slane %v384, 1
  %v389 = vrot.slane %v385, 1
  %v390 = vsel %vm263, %v388, %v389
  %v393 = vadd.f32 %v378, %v390
  %v394 = vadd.f32 %v379, %v389
  %v395 = vlaneseq
  %v396 = vshrl.u32 %v395, 7
  %v397 = vsub.s32 3, %v396
  %v398 = vrot.slane %v195, %v397
  %v399 = vmul.f32 %v398, %v369
  %v400 = vmul.f32 %v398, %v370
  %v403 = vrot.slane %v399, 2
  %v404 = vrot.slane %v400, 2
  %v405 = vsel %vm279, %v403, %v404
  %v408 = vadd.f32 %v393, %v405
  %v409 = vadd.f32 %v394, %v404
  %v410 = vlaneseq
  %v411 = vshrl.u32 %v410, 7
  %v412 = vsub.s32 0, %v411
  %v413 = vrot.slane %v196, %v412
  %v414 = vmul.f32 %v413, %v369
  %v415 = vmul.f32 %v413, %v370
  %v416 = vmul.f32 %v413, %v371
  %v420 = vrot.slane %v414, 3
  %v421 = vrot.slane %v415, 3
  %v422 = vsel %vm297, %v420, %v421
  %v423 = vrot.slane %v416, 3
  %v424 = vsel %vm297, %v421, %v423
  %v427 = vadd.f32 %v408, %v422
  %v428 = vadd.f32 %v409, %v424
  %v429 = vlaneseq
  %v430 = vshrl.u32 %v429, 7
  %v431 = vsub.s32 5, %v430
  %v432 = vrot.slane %v196, %v431
  %v433 = vmul.f32 %v432, %v369
  %v434 = vmul.f32 %v432, %v370
  %v435 = vmul.f32 %v432, %v371
  %v439 = vrot.slane %v433, 4
  %v440 = vrot.slane %v434, 4
  %v441 = vsel %vm317, %v439, %v440
  %v442 = vrot.slane %v435, 4
  %v443 = vsel %vm317, %v440, %v442
  %v446 = vadd.f32 %v427, %v441
  %v447 = vadd.f32 %v428, %v443
  %448 = vrot.lane.b32.xlu0 %v202, 126
  %v449 = vpop.permute.xlu0 %448
  %450 = vrot.lane.b32.xlu0 %v203, 126
  %v451 = vpop.permute.xlu0 %450
  %452 = vrot.lane.b32.xlu0 %v204, 126
  %v453 = vpop.permute.xlu0 %452
  %457 = vrot.lane.b32.xlu0 %v202, 12
  %v458 = vpop.permute.xlu0 %457
  %459 = vrot.lane.b32.xlu0 %v203, 12
  %v460 = vpop.permute.xlu0 %459
  %461 = vrot.lane.b32.xlu0 %v204, 12
  %v462 = vpop.permute.xlu0 %461
  %466 = vrot.lane.b32.xlu0 %v202, 26
  %v467 = vpop.permute.xlu0 %466
  %468 = vrot.lane.b32.xlu0 %v203, 26
  %v469 = vpop.permute.xlu0 %468
  %470 = vrot.lane.b32.xlu0 %v204, 26
  %v471 = vpop.permute.xlu0 %470
  %475 = vrot.lane.b32.xlu0 %v202, 40
  %v476 = vpop.permute.xlu0 %475
  %477 = vrot.lane.b32.xlu0 %v203, 40
  %v478 = vpop.permute.xlu0 %477
  %479 = vrot.lane.b32.xlu0 %v204, 40
  %v480 = vpop.permute.xlu0 %479
  %v484 = vsel %vm235, %v449, %v458
  %v485 = vsel %vm235, %v451, %v460
  %v486 = vsel %vm235, %v453, %v462
  %v487 = vsel %vm239, %v484, %v467
  %v488 = vsel %vm239, %v485, %v469
  %v489 = vsel %vm239, %v486, %v471
  %v490 = vsel %vm243, %v487, %v476
  %v491 = vsel %vm243, %v488, %v478
  %v492 = vsel %vm243, %v489, %v480
  %v493 = vlaneseq
  %v494 = vshrl.u32 %v493, 7
  %v495 = vsub.s32 2, %v494
  %v496 = vrot.slane %v194, %v495
  %v497 = vmul.f32 %v496, %v490
  %v498 = vmul.f32 %v496, %v491
  %v499 = vadd.f32 %v446, %v497
  %v500 = vadd.f32 %v447, %v498
  %v501 = vlaneseq
  %v502 = vshrl.u32 %v501, 7
  %v503 = vsub.s32 7, %v502
  %v504 = vrot.slane %v194, %v503
  %v505 = vmul.f32 %v504, %v490
  %v506 = vmul.f32 %v504, %v491
  %v509 = vrot.slane %v505, 1
  %v510 = vrot.slane %v506, 1
  %v511 = vsel %vm263, %v509, %v510
  %v514 = vadd.f32 %v499, %v511
  %v515 = vadd.f32 %v500, %v510
  %v516 = vlaneseq
  %v517 = vshrl.u32 %v516, 7
  %v518 = vsub.s32 4, %v517
  %v519 = vrot.slane %v195, %v518
  %v520 = vmul.f32 %v519, %v490
  %v521 = vmul.f32 %v519, %v491
  %v524 = vrot.slane %v520, 2
  %v525 = vrot.slane %v521, 2
  %v526 = vsel %vm279, %v524, %v525
  %v529 = vadd.f32 %v514, %v526
  %v530 = vadd.f32 %v515, %v525
  %v531 = vlaneseq
  %v532 = vshrl.u32 %v531, 7
  %v533 = vsub.s32 1, %v532
  %v534 = vrot.slane %v196, %v533
  %v535 = vmul.f32 %v534, %v490
  %v536 = vmul.f32 %v534, %v491
  %v537 = vmul.f32 %v534, %v492
  %v541 = vrot.slane %v535, 3
  %v542 = vrot.slane %v536, 3
  %v543 = vsel %vm297, %v541, %v542
  %v544 = vrot.slane %v537, 3
  %v545 = vsel %vm297, %v542, %v544
  %v548 = vadd.f32 %v529, %v543
  %v549 = vadd.f32 %v530, %v545
  %v550 = vlaneseq
  %v551 = vshrl.u32 %v550, 7
  %v552 = vsub.s32 6, %v551
  %v553 = vrot.slane %v196, %v552
  %v554 = vmul.f32 %v553, %v490
  %v555 = vmul.f32 %v553, %v491
  %v556 = vmul.f32 %v553, %v492
  %v560 = vrot.slane %v554, 4
  %v561 = vrot.slane %v555, 4
  %v562 = vsel %vm317, %v560, %v561
  %v563 = vrot.slane %v556, 4
  %v564 = vsel %vm317, %v561, %v563
  %v567 = vadd.f32 %v548, %v562
  %v568 = vadd.f32 %v549, %v564
  %569 = vrot.lane.b32.xlu0 %v202, 125
  %v570 = vpop.permute.xlu0 %569
  %571 = vrot.lane.b32.xlu0 %v203, 125
  %v572 = vpop.permute.xlu0 %571
  %573 = vrot.lane.b32.xlu0 %v204, 125
  %v574 = vpop.permute.xlu0 %573
  %578 = vrot.lane.b32.xlu0 %v202, 11
  %v579 = vpop.permute.xlu0 %578
  %580 = vrot.lane.b32.xlu0 %v203, 11
  %v581 = vpop.permute.xlu0 %580
  %582 = vrot.lane.b32.xlu0 %v204, 11
  %v583 = vpop.permute.xlu0 %582
  %587 = vrot.lane.b32.xlu0 %v202, 25
  %v588 = vpop.permute.xlu0 %587
  %589 = vrot.lane.b32.xlu0 %v203, 25
  %v590 = vpop.permute.xlu0 %589
  %591 = vrot.lane.b32.xlu0 %v204, 25
  %v592 = vpop.permute.xlu0 %591
  %596 = vrot.lane.b32.xlu0 %v202, 39
  %v597 = vpop.permute.xlu0 %596
  %598 = vrot.lane.b32.xlu0 %v203, 39
  %v599 = vpop.permute.xlu0 %598
  %600 = vrot.lane.b32.xlu0 %v204, 39
  %v601 = vpop.permute.xlu0 %600
  %v605 = vsel %vm235, %v570, %v579
  %v606 = vsel %vm235, %v572, %v581
  %v607 = vsel %vm235, %v574, %v583
  %v608 = vsel %vm239, %v605, %v588
  %v609 = vsel %vm239, %v606, %v590
  %v610 = vsel %vm239, %v607, %v592
  %v611 = vsel %vm243, %v608, %v597
  %v612 = vsel %vm243, %v609, %v599
  %v613 = vsel %vm243, %v610, %v601
  %v614 = vlaneseq
  %v615 = vshrl.u32 %v614, 7
  %v616 = vsub.s32 3, %v615
  %v617 = vrot.slane %v194, %v616
  %v618 = vmul.f32 %v617, %v611
  %v619 = vmul.f32 %v617, %v612
  %v620 = vadd.f32 %v567, %v618
  %v621 = vadd.f32 %v568, %v619
  %v622 = vlaneseq
  %v623 = vshrl.u32 %v622, 7
  %v624 = vsub.s32 0, %v623
  %v625 = vrot.slane %v195, %v624
  %v626 = vmul.f32 %v625, %v611
  %v627 = vmul.f32 %v625, %v612
  %v630 = vrot.slane %v626, 1
  %v631 = vrot.slane %v627, 1
  %v632 = vsel %vm263, %v630, %v631
  %v635 = vadd.f32 %v620, %v632
  %v636 = vadd.f32 %v621, %v631
  %v637 = vlaneseq
  %v638 = vshrl.u32 %v637, 7
  %v639 = vsub.s32 5, %v638
  %v640 = vrot.slane %v195, %v639
  %v641 = vmul.f32 %v640, %v611
  %v642 = vmul.f32 %v640, %v612
  %v645 = vrot.slane %v641, 2
  %v646 = vrot.slane %v642, 2
  %v647 = vsel %vm279, %v645, %v646
  %v650 = vadd.f32 %v635, %v647
  %v651 = vadd.f32 %v636, %v646
  %v652 = vlaneseq
  %v653 = vshrl.u32 %v652, 7
  %v654 = vsub.s32 2, %v653
  %v655 = vrot.slane %v196, %v654
  %v656 = vmul.f32 %v655, %v611
  %v657 = vmul.f32 %v655, %v612
  %v658 = vmul.f32 %v655, %v613
  %v662 = vrot.slane %v656, 3
  %v663 = vrot.slane %v657, 3
  %v664 = vsel %vm297, %v662, %v663
  %v665 = vrot.slane %v658, 3
  %v666 = vsel %vm297, %v663, %v665
  %v669 = vadd.f32 %v650, %v664
  %v670 = vadd.f32 %v651, %v666
  %v671 = vlaneseq
  %v672 = vshrl.u32 %v671, 7
  %v673 = vsub.s32 7, %v672
  %v674 = vrot.slane %v196, %v673
  %v675 = vmul.f32 %v674, %v611
  %v676 = vmul.f32 %v674, %v612
  %v677 = vmul.f32 %v674, %v613
  %v681 = vrot.slane %v675, 4
  %v682 = vrot.slane %v676, 4
  %v683 = vsel %vm317, %v681, %v682
  %v684 = vrot.slane %v677, 4
  %v685 = vsel %vm317, %v682, %v684
  %v688 = vadd.f32 %v669, %v683
  %v689 = vadd.f32 %v670, %v685
  %690 = vrot.lane.b32.xlu0 %v202, 124
  %v691 = vpop.permute.xlu0 %690
  %692 = vrot.lane.b32.xlu0 %v203, 124
  %v693 = vpop.permute.xlu0 %692
  %694 = vrot.lane.b32.xlu0 %v204, 124
  %v695 = vpop.permute.xlu0 %694
  %699 = vrot.lane.b32.xlu0 %v202, 10
  %v700 = vpop.permute.xlu0 %699
  %701 = vrot.lane.b32.xlu0 %v203, 10
  %v702 = vpop.permute.xlu0 %701
  %703 = vrot.lane.b32.xlu0 %v204, 10
  %v704 = vpop.permute.xlu0 %703
  %708 = vrot.lane.b32.xlu0 %v202, 24
  %v709 = vpop.permute.xlu0 %708
  %710 = vrot.lane.b32.xlu0 %v203, 24
  %v711 = vpop.permute.xlu0 %710
  %712 = vrot.lane.b32.xlu0 %v204, 24
  %v713 = vpop.permute.xlu0 %712
  %717 = vrot.lane.b32.xlu0 %v202, 38
  %v718 = vpop.permute.xlu0 %717
  %719 = vrot.lane.b32.xlu0 %v203, 38
  %v720 = vpop.permute.xlu0 %719
  %721 = vrot.lane.b32.xlu0 %v204, 38
  %v722 = vpop.permute.xlu0 %721
  %v726 = vsel %vm235, %v691, %v700
  %v727 = vsel %vm235, %v693, %v702
  %v728 = vsel %vm235, %v695, %v704
  %v729 = vsel %vm239, %v726, %v709
  %v730 = vsel %vm239, %v727, %v711
  %v731 = vsel %vm239, %v728, %v713
  %v732 = vsel %vm243, %v729, %v718
  %v733 = vsel %vm243, %v730, %v720
  %v734 = vsel %vm243, %v731, %v722
  %v735 = vlaneseq
  %v736 = vshrl.u32 %v735, 7
  %v737 = vsub.s32 4, %v736
  %v738 = vrot.slane %v194, %v737
  %v739 = vmul.f32 %v738, %v732
  %v740 = vmul.f32 %v738, %v733
  %v741 = vadd.f32 %v688, %v739
  %v742 = vadd.f32 %v689, %v740
  %v743 = vlaneseq
  %v744 = vshrl.u32 %v743, 7
  %v745 = vsub.s32 1, %v744
  %v746 = vrot.slane %v195, %v745
  %v747 = vmul.f32 %v746, %v732
  %v748 = vmul.f32 %v746, %v733
  %v751 = vrot.slane %v747, 1
  %v752 = vrot.slane %v748, 1
  %v753 = vsel %vm263, %v751, %v752
  %v756 = vadd.f32 %v741, %v753
  %v757 = vadd.f32 %v742, %v752
  %v758 = vlaneseq
  %v759 = vshrl.u32 %v758, 7
  %v760 = vsub.s32 6, %v759
  %v761 = vrot.slane %v195, %v760
  %v762 = vmul.f32 %v761, %v732
  %v763 = vmul.f32 %v761, %v733
  %v766 = vrot.slane %v762, 2
  %v767 = vrot.slane %v763, 2
  %v768 = vsel %vm279, %v766, %v767
  %v771 = vadd.f32 %v756, %v768
  %v772 = vadd.f32 %v757, %v767
  %v773 = vlaneseq
  %v774 = vshrl.u32 %v773, 7
  %v775 = vsub.s32 3, %v774
  %v776 = vrot.slane %v196, %v775
  %v777 = vmul.f32 %v776, %v732
  %v778 = vmul.f32 %v776, %v733
  %v779 = vmul.f32 %v776, %v734
  %v783 = vrot.slane %v777, 3
  %v784 = vrot.slane %v778, 3
  %v785 = vsel %vm297, %v783, %v784
  %v786 = vrot.slane %v779, 3
  %v787 = vsel %vm297, %v784, %v786
  %v790 = vadd.f32 %v771, %v785
  %v791 = vadd.f32 %v772, %v787
  %v792 = vlaneseq
  %v793 = vshrl.u32 %v792, 7
  %v794 = vsub.s32 0, %v793
  %v795 = vrot.slane %v197, %v794
  %v796 = vmul.f32 %v795, %v732
  %v797 = vmul.f32 %v795, %v733
  %v798 = vmul.f32 %v795, %v734
  %v802 = vrot.slane %v796, 4
  %v803 = vrot.slane %v797, 4
  %v804 = vsel %vm317, %v802, %v803
  %v805 = vrot.slane %v798, 4
  %v806 = vsel %vm317, %v803, %v805
  %v809 = vadd.f32 %v790, %v804
  %v810 = vadd.f32 %v791, %v806
  %vm811 = vcmask 457728
  %812 = vst.msk [vmem:[%s3] sm:$0xff] %vm811, %v809
  %vm813 = vcmask 455680
  %814 = vst.msk [vmem:[%s3 + $0x8] sm:$0x3f] %vm813, %v810
  %v815 = vld [vmem:[%s2] sm:$0xff]
  %v816 = vld [vmem:[%s2 + $0x8] sm:$0xff]
  %v817 = vld [vmem:[%s2 + $0x10] sm:$0xff]
  %v818 = vld [vmem:[%s2 + $0x18] sm:$0x3]
  %v819 = vlaneseq
  %v820 = vshrl.u32 %v819, 7
  %v821 = vsub.s32 1, %v820
  %v822 = vrot.slane %v818, %v821
  %v823 = vld [vmem:[#allocation3] sm:$0xff]
  %v824 = vld [vmem:[#allocation3 + $0x8] sm:$0xff]
  %v825 = vld [vmem:[#allocation3 + $0x10] sm:$0xff]
  %v826 = vld [vmem:[#allocation3 + $0x18] sm:$0xff]
  %v827 = vld [vmem:[#allocation3 + $0x20] sm:$0xff]
  %v828 = vld [vmem:[#allocation3 + $0x28] sm:$0xff]
  %v829 = vld [vmem:[#allocation3 + $0x30] sm:$0x3f]
  %837 = vrot.lane.b32.xlu0 %v823, 32
  %v838 = vpop.permute.xlu0 %837
  %839 = vrot.lane.b32.xlu0 %v824, 32
  %v840 = vpop.permute.xlu0 %839
  %841 = vrot.lane.b32.xlu0 %v825, 32
  %v842 = vpop.permute.xlu0 %841
  %843 = vrot.lane.b32.xlu0 %v826, 32
  %v844 = vpop.permute.xlu0 %843
  %845 = vrot.lane.b32.xlu0 %v827, 32
  %v846 = vpop.permute.xlu0 %845
  %847 = vrot.lane.b32.xlu0 %v828, 32
  %v848 = vpop.permute.xlu0 %847
  %849 = vrot.lane.b32.xlu0 %v829, 32
  %v850 = vpop.permute.xlu0 %849
  %858 = vrot.lane.b32.xlu0 %v823, 64
  %v859 = vpop.permute.xlu0 %858
  %860 = vrot.lane.b32.xlu0 %v824, 64
  %v861 = vpop.permute.xlu0 %860
  %862 = vrot.lane.b32.xlu0 %v825, 64
  %v863 = vpop.permute.xlu0 %862
  %864 = vrot.lane.b32.xlu0 %v826, 64
  %v865 = vpop.permute.xlu0 %864
  %866 = vrot.lane.b32.xlu0 %v827, 64
  %v867 = vpop.permute.xlu0 %866
  %868 = vrot.lane.b32.xlu0 %v828, 64
  %v869 = vpop.permute.xlu0 %868
  %870 = vrot.lane.b32.xlu0 %v829, 64
  %v871 = vpop.permute.xlu0 %870
  %879 = vrot.lane.b32.xlu0 %v823, 96
  %v880 = vpop.permute.xlu0 %879
  %881 = vrot.lane.b32.xlu0 %v824, 96
  %v882 = vpop.permute.xlu0 %881
  %883 = vrot.lane.b32.xlu0 %v825, 96
  %v884 = vpop.permute.xlu0 %883
  %885 = vrot.lane.b32.xlu0 %v826, 96
  %v886 = vpop.permute.xlu0 %885
  %887 = vrot.lane.b32.xlu0 %v827, 96
  %v888 = vpop.permute.xlu0 %887
  %889 = vrot.lane.b32.xlu0 %v828, 96
  %v890 = vpop.permute.xlu0 %889
  %891 = vrot.lane.b32.xlu0 %v829, 96
  %v892 = vpop.permute.xlu0 %891
  %vm900 = vcmask 261120
  %v901 = vsel %vm900, %v823, %v838
  %v902 = vsel %vm900, %v824, %v840
  %v903 = vsel %vm900, %v825, %v842
  %v904 = vsel %vm900, %v826, %v844
  %v905 = vsel %vm900, %v827, %v846
  %v906 = vsel %vm900, %v828, %v848
  %v907 = vsel %vm900, %v829, %v850
  %vm908 = vcmask 523264
  %v909 = vsel %vm908, %v901, %v859
  %v910 = vsel %vm908, %v902, %v861
  %v911 = vsel %vm908, %v903, %v863
  %v912 = vsel %vm908, %v904, %v865
  %v913 = vsel %vm908, %v905, %v867
  %v914 = vsel %vm908, %v906, %v869
  %v915 = vsel %vm908, %v907, %v871
  %vm916 = vcmask 785408
  %v917 = vsel %vm916, %v909, %v880
  %v918 = vsel %vm916, %v910, %v882
  %v919 = vsel %vm916, %v911, %v884
  %v920 = vsel %vm916, %v912, %v886
  %v921 = vsel %vm916, %v913, %v888
  %v922 = vsel %vm916, %v914, %v890
  %v923 = vsel %vm916, %v915, %v892
  %v924 = vlaneseq
  %v925 = vshrl.u32 %v924, 7
  %v926 = vsub.s32 0, %v925
  %v927 = vrot.slane %v815, %v926
  %v928 = vmul.f32 %v927, %v917
  %v929 = vmul.f32 %v927, %v918
  %v930 = vmul.f32 %v927, %v919
  %v931 = vmul.f32 %v927, %v920
  %v932 = vmul.f32 %v927, %v921
  %v933 = vmul.f32 %v927, %v922
  %v934 = vmul.f32 %v927, %v923
  %v935 = vadd.f32 %v822, %v928
  %v936 = vadd.f32 %v822, %v929
  %v937 = vadd.f32 %v822, %v930
  %v938 = vadd.f32 %v822, %v931
  %v939 = vadd.f32 %v822, %v932
  %v940 = vadd.f32 %v822, %v933
  %v941 = vadd.f32 %v822, %v934
  %v942 = vlaneseq
  %v943 = vshrl.u32 %v942, 7
  %v944 = vsub.s32 5, %v943
  %v945 = vrot.slane %v815, %v944
  %v946 = vmul.f32 %v945, %v917
  %v947 = vmul.f32 %v945, %v918
  %v948 = vmul.f32 %v945, %v919
  %v949 = vmul.f32 %v945, %v920
  %v950 = vmul.f32 %v945, %v921
  %v951 = vmul.f32 %v945, %v922
  %v952 = vmul.f32 %v945, %v923
  %v960 = vrot.slane %v946, 1
  %v961 = vrot.slane %v947, 1
  %v962 = vsel %vm263, %v960, %v961
  %v963 = vrot.slane %v948, 1
  %v964 = vsel %vm263, %v961, %v963
  %v965 = vrot.slane %v949, 1
  %v966 = vsel %vm263, %v963, %v965
  %v967 = vrot.slane %v950, 1
  %v968 = vsel %vm263, %v965, %v967
  %v969 = vrot.slane %v951, 1
  %v970 = vsel %vm263, %v967, %v969
  %v971 = vrot.slane %v952, 1
  %v972 = vsel %vm263, %v969, %v971
  %v980 = vadd.f32 %v935, %v962
  %v981 = vadd.f32 %v936, %v964
  %v982 = vadd.f32 %v937, %v966
  %v983 = vadd.f32 %v938, %v968
  %v984 = vadd.f32 %v939, %v970
  %v985 = vadd.f32 %v940, %v972
  %v986 = vadd.f32 %v941, %v971
  %v987 = vlaneseq
  %v988 = vshrl.u32 %v987, 7
  %v989 = vsub.s32 2, %v988
  %v990 = vrot.slane %v816, %v989
  %v991 = vmul.f32 %v990, %v917
  %v992 = vmul.f32 %v990, %v918
  %v993 = vmul.f32 %v990, %v919
  %v994 = vmul.f32 %v990, %v920
  %v995 = vmul.f32 %v990, %v921
  %v996 = vmul.f32 %v990, %v922
  %v997 = vmul.f32 %v990, %v923
  %v1005 = vrot.slane %v991, 2
  %v1006 = vrot.slane %v992, 2
  %v1007 = vsel %vm279, %v1005, %v1006
  %v1008 = vrot.slane %v993, 2
  %v1009 = vsel %vm279, %v1006, %v1008
  %v1010 = vrot.slane %v994, 2
  %v1011 = vsel %vm279, %v1008, %v1010
  %v1012 = vrot.slane %v995, 2
  %v1013 = vsel %vm279, %v1010, %v1012
  %v1014 = vrot.slane %v996, 2
  %v1015 = vsel %vm279, %v1012, %v1014
  %v1016 = vrot.slane %v997, 2
  %v1017 = vsel %vm279, %v1014, %v1016
  %v1025 = vadd.f32 %v980, %v1007
  %v1026 = vadd.f32 %v981, %v1009
  %v1027 = vadd.f32 %v982, %v1011
  %v1028 = vadd.f32 %v983, %v1013
  %v1029 = vadd.f32 %v984, %v1015
  %v1030 = vadd.f32 %v985, %v1017
  %v1031 = vadd.f32 %v986, %v1016
  %v1032 = vlaneseq
  %v1033 = vshrl.u32 %v1032, 7
  %v1034 = vsub.s32 7, %v1033
  %v1035 = vrot.slane %v816, %v1034
  %v1036 = vmul.f32 %v1035, %v917
  %v1037 = vmul.f32 %v1035, %v918
  %v1038 = vmul.f32 %v1035, %v919
  %v1039 = vmul.f32 %v1035, %v920
  %v1040 = vmul.f32 %v1035, %v921
  %v1041 = vmul.f32 %v1035, %v922
  %v1042 = vmul.f32 %v1035, %v923
  %v1050 = vrot.slane %v1036, 3
  %v1051 = vrot.slane %v1037, 3
  %v1052 = vsel %vm297, %v1050, %v1051
  %v1053 = vrot.slane %v1038, 3
  %v1054 = vsel %vm297, %v1051, %v1053
  %v1055 = vrot.slane %v1039, 3
  %v1056 = vsel %vm297, %v1053, %v1055
  %v1057 = vrot.slane %v1040, 3
  %v1058 = vsel %vm297, %v1055, %v1057
  %v1059 = vrot.slane %v1041, 3
  %v1060 = vsel %vm297, %v1057, %v1059
  %v1061 = vrot.slane %v1042, 3
  %v1062 = vsel %vm297, %v1059, %v1061
  %v1070 = vadd.f32 %v1025, %v1052
  %v1071 = vadd.f32 %v1026, %v1054
  %v1072 = vadd.f32 %v1027, %v1056
  %v1073 = vadd.f32 %v1028, %v1058
  %v1074 = vadd.f32 %v1029, %v1060
  %v1075 = vadd.f32 %v1030, %v1062
  %v1076 = vadd.f32 %v1031, %v1061
  %v1077 = vlaneseq
  %v1078 = vshrl.u32 %v1077, 7
  %v1079 = vsub.s32 4, %v1078
  %v1080 = vrot.slane %v817, %v1079
  %v1081 = vmul.f32 %v1080, %v917
  %v1082 = vmul.f32 %v1080, %v918
  %v1083 = vmul.f32 %v1080, %v919
  %v1084 = vmul.f32 %v1080, %v920
  %v1085 = vmul.f32 %v1080, %v921
  %v1086 = vmul.f32 %v1080, %v922
  %v1087 = vmul.f32 %v1080, %v923
  %v1095 = vrot.slane %v1081, 4
  %v1096 = vrot.slane %v1082, 4
  %v1097 = vsel %vm317, %v1095, %v1096
  %v1098 = vrot.slane %v1083, 4
  %v1099 = vsel %vm317, %v1096, %v1098
  %v1100 = vrot.slane %v1084, 4
  %v1101 = vsel %vm317, %v1098, %v1100
  %v1102 = vrot.slane %v1085, 4
  %v1103 = vsel %vm317, %v1100, %v1102
  %v1104 = vrot.slane %v1086, 4
  %v1105 = vsel %vm317, %v1102, %v1104
  %v1106 = vrot.slane %v1087, 4
  %v1107 = vsel %vm317, %v1104, %v1106
  %v1115 = vadd.f32 %v1070, %v1097
  %v1116 = vadd.f32 %v1071, %v1099
  %v1117 = vadd.f32 %v1072, %v1101
  %v1118 = vadd.f32 %v1073, %v1103
  %v1119 = vadd.f32 %v1074, %v1105
  %v1120 = vadd.f32 %v1075, %v1107
  %v1121 = vadd.f32 %v1076, %v1106
  %1122 = vrot.lane.b32.xlu0 %v823, 127
  %v1123 = vpop.permute.xlu0 %1122
  %1124 = vrot.lane.b32.xlu0 %v824, 127
  %v1125 = vpop.permute.xlu0 %1124
  %1126 = vrot.lane.b32.xlu0 %v825, 127
  %v1127 = vpop.permute.xlu0 %1126
  %1128 = vrot.lane.b32.xlu0 %v826, 127
  %v1129 = vpop.permute.xlu0 %1128
  %1130 = vrot.lane.b32.xlu0 %v827, 127
  %v1131 = vpop.permute.xlu0 %1130
  %1132 = vrot.lane.b32.xlu0 %v828, 127
  %v1133 = vpop.permute.xlu0 %1132
  %1134 = vrot.lane.b32.xlu0 %v829, 127
  %v1135 = vpop.permute.xlu0 %1134
  %1143 = vrot.lane.b32.xlu0 %v823, 31
  %v1144 = vpop.permute.xlu0 %1143
  %1145 = vrot.lane.b32.xlu0 %v824, 31
  %v1146 = vpop.permute.xlu0 %1145
  %1147 = vrot.lane.b32.xlu0 %v825, 31
  %v1148 = vpop.permute.xlu0 %1147
  %1149 = vrot.lane.b32.xlu0 %v826, 31
  %v1150 = vpop.permute.xlu0 %1149
  %1151 = vrot.lane.b32.xlu0 %v827, 31
  %v1152 = vpop.permute.xlu0 %1151
  %1153 = vrot.lane.b32.xlu0 %v828, 31
  %v1154 = vpop.permute.xlu0 %1153
  %1155 = vrot.lane.b32.xlu0 %v829, 31
  %v1156 = vpop.permute.xlu0 %1155
  %1164 = vrot.lane.b32.xlu0 %v823, 63
  %v1165 = vpop.permute.xlu0 %1164
  %1166 = vrot.lane.b32.xlu0 %v824, 63
  %v1167 = vpop.permute.xlu0 %1166
  %1168 = vrot.lane.b32.xlu0 %v825, 63
  %v1169 = vpop.permute.xlu0 %1168
  %1170 = vrot.lane.b32.xlu0 %v826, 63
  %v1171 = vpop.permute.xlu0 %1170
  %1172 = vrot.lane.b32.xlu0 %v827, 63
  %v1173 = vpop.permute.xlu0 %1172
  %1174 = vrot.lane.b32.xlu0 %v828, 63
  %v1175 = vpop.permute.xlu0 %1174
  %1176 = vrot.lane.b32.xlu0 %v829, 63
  %v1177 = vpop.permute.xlu0 %1176
  %1185 = vrot.lane.b32.xlu0 %v823, 95
  %v1186 = vpop.permute.xlu0 %1185
  %1187 = vrot.lane.b32.xlu0 %v824, 95
  %v1188 = vpop.permute.xlu0 %1187
  %1189 = vrot.lane.b32.xlu0 %v825, 95
  %v1190 = vpop.permute.xlu0 %1189
  %1191 = vrot.lane.b32.xlu0 %v826, 95
  %v1192 = vpop.permute.xlu0 %1191
  %1193 = vrot.lane.b32.xlu0 %v827, 95
  %v1194 = vpop.permute.xlu0 %1193
  %1195 = vrot.lane.b32.xlu0 %v828, 95
  %v1196 = vpop.permute.xlu0 %1195
  %1197 = vrot.lane.b32.xlu0 %v829, 95
  %v1198 = vpop.permute.xlu0 %1197
  %v1206 = vsel %vm900, %v1123, %v1144
  %v1207 = vsel %vm900, %v1125, %v1146
  %v1208 = vsel %vm900, %v1127, %v1148
  %v1209 = vsel %vm900, %v1129, %v1150
  %v1210 = vsel %vm900, %v1131, %v1152
  %v1211 = vsel %vm900, %v1133, %v1154
  %v1212 = vsel %vm900, %v1135, %v1156
  %v1213 = vsel %vm908, %v1206, %v1165
  %v1214 = vsel %vm908, %v1207, %v1167
  %v1215 = vsel %vm908, %v1208, %v1169
  %v1216 = vsel %vm908, %v1209, %v1171
  %v1217 = vsel %vm908, %v1210, %v1173
  %v1218 = vsel %vm908, %v1211, %v1175
  %v1219 = vsel %vm908, %v1212, %v1177
  %v1220 = vsel %vm916, %v1213, %v1186
  %v1221 = vsel %vm916, %v1214, %v1188
  %v1222 = vsel %vm916, %v1215, %v1190
  %v1223 = vsel %vm916, %v1216, %v1192
  %v1224 = vsel %vm916, %v1217, %v1194
  %v1225 = vsel %vm916, %v1218, %v1196
  %v1226 = vsel %vm916, %v1219, %v1198
  %v1227 = vlaneseq
  %v1228 = vshrl.u32 %v1227, 7
  %v1229 = vsub.s32 1, %v1228
  %v1230 = vrot.slane %v815, %v1229
  %v1231 = vmul.f32 %v1230, %v1220
  %v1232 = vmul.f32 %v1230, %v1221
  %v1233 = vmul.f32 %v1230, %v1222
  %v1234 = vmul.f32 %v1230, %v1223
  %v1235 = vmul.f32 %v1230, %v1224
  %v1236 = vmul.f32 %v1230, %v1225
  %v1237 = vmul.f32 %v1230, %v1226
  %v1238 = vadd.f32 %v1115, %v1231
  %v1239 = vadd.f32 %v1116, %v1232
  %v1240 = vadd.f32 %v1117, %v1233
  %v1241 = vadd.f32 %v1118, %v1234
  %v1242 = vadd.f32 %v1119, %v1235
  %v1243 = vadd.f32 %v1120, %v1236
  %v1244 = vadd.f32 %v1121, %v1237
  %v1245 = vlaneseq
  %v1246 = vshrl.u32 %v1245, 7
  %v1247 = vsub.s32 6, %v1246
  %v1248 = vrot.slane %v815, %v1247
  %v1249 = vmul.f32 %v1248, %v1220
  %v1250 = vmul.f32 %v1248, %v1221
  %v1251 = vmul.f32 %v1248, %v1222
  %v1252 = vmul.f32 %v1248, %v1223
  %v1253 = vmul.f32 %v1248, %v1224
  %v1254 = vmul.f32 %v1248, %v1225
  %v1255 = vmul.f32 %v1248, %v1226
  %v1263 = vrot.slane %v1249, 1
  %v1264 = vrot.slane %v1250, 1
  %v1265 = vsel %vm263, %v1263, %v1264
  %v1266 = vrot.slane %v1251, 1
  %v1267 = vsel %vm263, %v1264, %v1266
  %v1268 = vrot.slane %v1252, 1
  %v1269 = vsel %vm263, %v1266, %v1268
  %v1270 = vrot.slane %v1253, 1
  %v1271 = vsel %vm263, %v1268, %v1270
  %v1272 = vrot.slane %v1254, 1
  %v1273 = vsel %vm263, %v1270, %v1272
  %v1274 = vrot.slane %v1255, 1
  %v1275 = vsel %vm263, %v1272, %v1274
  %v1283 = vadd.f32 %v1238, %v1265
  %v1284 = vadd.f32 %v1239, %v1267
  %v1285 = vadd.f32 %v1240, %v1269
  %v1286 = vadd.f32 %v1241, %v1271
  %v1287 = vadd.f32 %v1242, %v1273
  %v1288 = vadd.f32 %v1243, %v1275
  %v1289 = vadd.f32 %v1244, %v1274
  %v1290 = vlaneseq
  %v1291 = vshrl.u32 %v1290, 7
  %v1292 = vsub.s32 3, %v1291
  %v1293 = vrot.slane %v816, %v1292
  %v1294 = vmul.f32 %v1293, %v1220
  %v1295 = vmul.f32 %v1293, %v1221
  %v1296 = vmul.f32 %v1293, %v1222
  %v1297 = vmul.f32 %v1293, %v1223
  %v1298 = vmul.f32 %v1293, %v1224
  %v1299 = vmul.f32 %v1293, %v1225
  %v1300 = vmul.f32 %v1293, %v1226
  %v1308 = vrot.slane %v1294, 2
  %v1309 = vrot.slane %v1295, 2
  %v1310 = vsel %vm279, %v1308, %v1309
  %v1311 = vrot.slane %v1296, 2
  %v1312 = vsel %vm279, %v1309, %v1311
  %v1313 = vrot.slane %v1297, 2
  %v1314 = vsel %vm279, %v1311, %v1313
  %v1315 = vrot.slane %v1298, 2
  %v1316 = vsel %vm279, %v1313, %v1315
  %v1317 = vrot.slane %v1299, 2
  %v1318 = vsel %vm279, %v1315, %v1317
  %v1319 = vrot.slane %v1300, 2
  %v1320 = vsel %vm279, %v1317, %v1319
  %v1328 = vadd.f32 %v1283, %v1310
  %v1329 = vadd.f32 %v1284, %v1312
  %v1330 = vadd.f32 %v1285, %v1314
  %v1331 = vadd.f32 %v1286, %v1316
  %v1332 = vadd.f32 %v1287, %v1318
  %v1333 = vadd.f32 %v1288, %v1320
  %v1334 = vadd.f32 %v1289, %v1319
  %v1335 = vlaneseq
  %v1336 = vshrl.u32 %v1335, 7
  %v1337 = vsub.s32 0, %v1336
  %v1338 = vrot.slane %v817, %v1337
  %v1339 = vmul.f32 %v1338, %v1220
  %v1340 = vmul.f32 %v1338, %v1221
  %v1341 = vmul.f32 %v1338, %v1222
  %v1342 = vmul.f32 %v1338, %v1223
  %v1343 = vmul.f32 %v1338, %v1224
  %v1344 = vmul.f32 %v1338, %v1225
  %v1345 = vmul.f32 %v1338, %v1226
  %v1353 = vrot.slane %v1339, 3
  %v1354 = vrot.slane %v1340, 3
  %v1355 = vsel %vm297, %v1353, %v1354
  %v1356 = vrot.slane %v1341, 3
  %v1357 = vsel %vm297, %v1354, %v1356
  %v1358 = vrot.slane %v1342, 3
  %v1359 = vsel %vm297, %v1356, %v1358
  %v1360 = vrot.slane %v1343, 3
  %v1361 = vsel %vm297, %v1358, %v1360
  %v1362 = vrot.slane %v1344, 3
  %v1363 = vsel %vm297, %v1360, %v1362
  %v1364 = vrot.slane %v1345, 3
  %v1365 = vsel %vm297, %v1362, %v1364
  %v1373 = vadd.f32 %v1328, %v1355
  %v1374 = vadd.f32 %v1329, %v1357
  %v1375 = vadd.f32 %v1330, %v1359
  %v1376 = vadd.f32 %v1331, %v1361
  %v1377 = vadd.f32 %v1332, %v1363
  %v1378 = vadd.f32 %v1333, %v1365
  %v1379 = vadd.f32 %v1334, %v1364
  %v1380 = vlaneseq
  %v1381 = vshrl.u32 %v1380, 7
  %v1382 = vsub.s32 5, %v1381
  %v1383 = vrot.slane %v817, %v1382
  %v1384 = vmul.f32 %v1383, %v1220
  %v1385 = vmul.f32 %v1383, %v1221
  %v1386 = vmul.f32 %v1383, %v1222
  %v1387 = vmul.f32 %v1383, %v1223
  %v1388 = vmul.f32 %v1383, %v1224
  %v1389 = vmul.f32 %v1383, %v1225
  %v1390 = vmul.f32 %v1383, %v1226
  %v1398 = vrot.slane %v1384, 4
  %v1399 = vrot.slane %v1385, 4
  %v1400 = vsel %vm317, %v1398, %v1399
  %v1401 = vrot.slane %v1386, 4
  %v1402 = vsel %vm317, %v1399, %v1401
  %v1403 = vrot.slane %v1387, 4
  %v1404 = vsel %vm317, %v1401, %v1403
  %v1405 = vrot.slane %v1388, 4
  %v1406 = vsel %vm317, %v1403, %v1405
  %v1407 = vrot.slane %v1389, 4
  %v1408 = vsel %vm317, %v1405, %v1407
  %v1409 = vrot.slane %v1390, 4
  %v1410 = vsel %vm317, %v1407, %v1409
  %v1418 = vadd.f32 %v1373, %v1400
  %v1419 = vadd.f32 %v1374, %v1402
  %v1420 = vadd.f32 %v1375, %v1404
  %v1421 = vadd.f32 %v1376, %v1406
  %v1422 = vadd.f32 %v1377, %v1408
  %v1423 = vadd.f32 %v1378, %v1410
  %v1424 = vadd.f32 %v1379, %v1409
  %1425 = vrot.lane.b32.xlu0 %v823, 126
  %v1426 = vpop.permute.xlu0 %1425
  %1427 = vrot.lane.b32.xlu0 %v824, 126
  %v1428 = vpop.permute.xlu0 %1427
  %1429 = vrot.lane.b32.xlu0 %v825, 126
  %v1430 = vpop.permute.xlu0 %1429
  %1431 = vrot.lane.b32.xlu0 %v826, 126
  %v1432 = vpop.permute.xlu0 %1431
  %1433 = vrot.lane.b32.xlu0 %v827, 126
  %v1434 = vpop.permute.xlu0 %1433
  %1435 = vrot.lane.b32.xlu0 %v828, 126
  %v1436 = vpop.permute.xlu0 %1435
  %1437 = vrot.lane.b32.xlu0 %v829, 126
  %v1438 = vpop.permute.xlu0 %1437
  %1446 = vrot.lane.b32.xlu0 %v823, 30
  %v1447 = vpop.permute.xlu0 %1446
  %1448 = vrot.lane.b32.xlu0 %v824, 30
  %v1449 = vpop.permute.xlu0 %1448
  %1450 = vrot.lane.b32.xlu0 %v825, 30
  %v1451 = vpop.permute.xlu0 %1450
  %1452 = vrot.lane.b32.xlu0 %v826, 30
  %v1453 = vpop.permute.xlu0 %1452
  %1454 = vrot.lane.b32.xlu0 %v827, 30
  %v1455 = vpop.permute.xlu0 %1454
  %1456 = vrot.lane.b32.xlu0 %v828, 30
  %v1457 = vpop.permute.xlu0 %1456
  %1458 = vrot.lane.b32.xlu0 %v829, 30
  %v1459 = vpop.permute.xlu0 %1458
  %1467 = vrot.lane.b32.xlu0 %v823, 62
  %v1468 = vpop.permute.xlu0 %1467
  %1469 = vrot.lane.b32.xlu0 %v824, 62
  %v1470 = vpop.permute.xlu0 %1469
  %1471 = vrot.lane.b32.xlu0 %v825, 62
  %v1472 = vpop.permute.xlu0 %1471
  %1473 = vrot.lane.b32.xlu0 %v826, 62
  %v1474 = vpop.permute.xlu0 %1473
  %1475 = vrot.lane.b32.xlu0 %v827, 62
  %v1476 = vpop.permute.xlu0 %1475
  %1477 = vrot.lane.b32.xlu0 %v828, 62
  %v1478 = vpop.permute.xlu0 %1477
  %1479 = vrot.lane.b32.xlu0 %v829, 62
  %v1480 = vpop.permute.xlu0 %1479
  %1488 = vrot.lane.b32.xlu0 %v823, 94
  %v1489 = vpop.permute.xlu0 %1488
  %1490 = vrot.lane.b32.xlu0 %v824, 94
  %v1491 = vpop.permute.xlu0 %1490
  %1492 = vrot.lane.b32.xlu0 %v825, 94
  %v1493 = vpop.permute.xlu0 %1492
  %1494 = vrot.lane.b32.xlu0 %v826, 94
  %v1495 = vpop.permute.xlu0 %1494
  %1496 = vrot.lane.b32.xlu0 %v827, 94
  %v1497 = vpop.permute.xlu0 %1496
  %1498 = vrot.lane.b32.xlu0 %v828, 94
  %v1499 = vpop.permute.xlu0 %1498
  %1500 = vrot.lane.b32.xlu0 %v829, 94
  %v1501 = vpop.permute.xlu0 %1500
  %v1509 = vsel %vm900, %v1426, %v1447
  %v1510 = vsel %vm900, %v1428, %v1449
  %v1511 = vsel %vm900, %v1430, %v1451
  %v1512 = vsel %vm900, %v1432, %v1453
  %v1513 = vsel %vm900, %v1434, %v1455
  %v1514 = vsel %vm900, %v1436, %v1457
  %v1515 = vsel %vm900, %v1438, %v1459
  %v1516 = vsel %vm908, %v1509, %v1468
  %v1517 = vsel %vm908, %v1510, %v1470
  %v1518 = vsel %vm908, %v1511, %v1472
  %v1519 = vsel %vm908, %v1512, %v1474
  %v1520 = vsel %vm908, %v1513, %v1476
  %v1521 = vsel %vm908, %v1514, %v1478
  %v1522 = vsel %vm908, %v1515, %v1480
  %v1523 = vsel %vm916, %v1516, %v1489
  %v1524 = vsel %vm916, %v1517, %v1491
  %v1525 = vsel %vm916, %v1518, %v1493
  %v1526 = vsel %vm916, %v1519, %v1495
  %v1527 = vsel %vm916, %v1520, %v1497
  %v1528 = vsel %vm916, %v1521, %v1499
  %v1529 = vsel %vm916, %v1522, %v1501
  %v1530 = vlaneseq
  %v1531 = vshrl.u32 %v1530, 7
  %v1532 = vsub.s32 2, %v1531
  %v1533 = vrot.slane %v815, %v1532
  %v1534 = vmul.f32 %v1533, %v1523
  %v1535 = vmul.f32 %v1533, %v1524
  %v1536 = vmul.f32 %v1533, %v1525
  %v1537 = vmul.f32 %v1533, %v1526
  %v1538 = vmul.f32 %v1533, %v1527
  %v1539 = vmul.f32 %v1533, %v1528
  %v1540 = vmul.f32 %v1533, %v1529
  %v1541 = vadd.f32 %v1418, %v1534
  %v1542 = vadd.f32 %v1419, %v1535
  %v1543 = vadd.f32 %v1420, %v1536
  %v1544 = vadd.f32 %v1421, %v1537
  %v1545 = vadd.f32 %v1422, %v1538
  %v1546 = vadd.f32 %v1423, %v1539
  %v1547 = vadd.f32 %v1424, %v1540
  %v1548 = vlaneseq
  %v1549 = vshrl.u32 %v1548, 7
  %v1550 = vsub.s32 7, %v1549
  %v1551 = vrot.slane %v815, %v1550
  %v1552 = vmul.f32 %v1551, %v1523
  %v1553 = vmul.f32 %v1551, %v1524
  %v1554 = vmul.f32 %v1551, %v1525
  %v1555 = vmul.f32 %v1551, %v1526
  %v1556 = vmul.f32 %v1551, %v1527
  %v1557 = vmul.f32 %v1551, %v1528
  %v1558 = vmul.f32 %v1551, %v1529
  %v1566 = vrot.slane %v1552, 1
  %v1567 = vrot.slane %v1553, 1
  %v1568 = vsel %vm263, %v1566, %v1567
  %v1569 = vrot.slane %v1554, 1
  %v1570 = vsel %vm263, %v1567, %v1569
  %v1571 = vrot.slane %v1555, 1
  %v1572 = vsel %vm263, %v1569, %v1571
  %v1573 = vrot.slane %v1556, 1
  %v1574 = vsel %vm263, %v1571, %v1573
  %v1575 = vrot.slane %v1557, 1
  %v1576 = vsel %vm263, %v1573, %v1575
  %v1577 = vrot.slane %v1558, 1
  %v1578 = vsel %vm263, %v1575, %v1577
  %v1586 = vadd.f32 %v1541, %v1568
  %v1587 = vadd.f32 %v1542, %v1570
  %v1588 = vadd.f32 %v1543, %v1572
  %v1589 = vadd.f32 %v1544, %v1574
  %v1590 = vadd.f32 %v1545, %v1576
  %v1591 = vadd.f32 %v1546, %v1578
  %v1592 = vadd.f32 %v1547, %v1577
  %v1593 = vlaneseq
  %v1594 = vshrl.u32 %v1593, 7
  %v1595 = vsub.s32 4, %v1594
  %v1596 = vrot.slane %v816, %v1595
  %v1597 = vmul.f32 %v1596, %v1523
  %v1598 = vmul.f32 %v1596, %v1524
  %v1599 = vmul.f32 %v1596, %v1525
  %v1600 = vmul.f32 %v1596, %v1526
  %v1601 = vmul.f32 %v1596, %v1527
  %v1602 = vmul.f32 %v1596, %v1528
  %v1603 = vmul.f32 %v1596, %v1529
  %v1611 = vrot.slane %v1597, 2
  %v1612 = vrot.slane %v1598, 2
  %v1613 = vsel %vm279, %v1611, %v1612
  %v1614 = vrot.slane %v1599, 2
  %v1615 = vsel %vm279, %v1612, %v1614
  %v1616 = vrot.slane %v1600, 2
  %v1617 = vsel %vm279, %v1614, %v1616
  %v1618 = vrot.slane %v1601, 2
  %v1619 = vsel %vm279, %v1616, %v1618
  %v1620 = vrot.slane %v1602, 2
  %v1621 = vsel %vm279, %v1618, %v1620
  %v1622 = vrot.slane %v1603, 2
  %v1623 = vsel %vm279, %v1620, %v1622
  %v1631 = vadd.f32 %v1586, %v1613
  %v1632 = vadd.f32 %v1587, %v1615
  %v1633 = vadd.f32 %v1588, %v1617
  %v1634 = vadd.f32 %v1589, %v1619
  %v1635 = vadd.f32 %v1590, %v1621
  %v1636 = vadd.f32 %v1591, %v1623
  %v1637 = vadd.f32 %v1592, %v1622
  %v1638 = vlaneseq
  %v1639 = vshrl.u32 %v1638, 7
  %v1640 = vsub.s32 1, %v1639
  %v1641 = vrot.slane %v817, %v1640
  %v1642 = vmul.f32 %v1641, %v1523
  %v1643 = vmul.f32 %v1641, %v1524
  %v1644 = vmul.f32 %v1641, %v1525
  %v1645 = vmul.f32 %v1641, %v1526
  %v1646 = vmul.f32 %v1641, %v1527
  %v1647 = vmul.f32 %v1641, %v1528
  %v1648 = vmul.f32 %v1641, %v1529
  %v1656 = vrot.slane %v1642, 3
  %v1657 = vrot.slane %v1643, 3
  %v1658 = vsel %vm297, %v1656, %v1657
  %v1659 = vrot.slane %v1644, 3
  %v1660 = vsel %vm297, %v1657, %v1659
  %v1661 = vrot.slane %v1645, 3
  %v1662 = vsel %vm297, %v1659, %v1661
  %v1663 = vrot.slane %v1646, 3
  %v1664 = vsel %vm297, %v1661, %v1663
  %v1665 = vrot.slane %v1647, 3
  %v1666 = vsel %vm297, %v1663, %v1665
  %v1667 = vrot.slane %v1648, 3
  %v1668 = vsel %vm297, %v1665, %v1667
  %v1676 = vadd.f32 %v1631, %v1658
  %v1677 = vadd.f32 %v1632, %v1660
  %v1678 = vadd.f32 %v1633, %v1662
  %v1679 = vadd.f32 %v1634, %v1664
  %v1680 = vadd.f32 %v1635, %v1666
  %v1681 = vadd.f32 %v1636, %v1668
  %v1682 = vadd.f32 %v1637, %v1667
  %v1683 = vlaneseq
  %v1684 = vshrl.u32 %v1683, 7
  %v1685 = vsub.s32 6, %v1684
  %v1686 = vrot.slane %v817, %v1685
  %v1687 = vmul.f32 %v1686, %v1523
  %v1688 = vmul.f32 %v1686, %v1524
  %v1689 = vmul.f32 %v1686, %v1525
  %v1690 = vmul.f32 %v1686, %v1526
  %v1691 = vmul.f32 %v1686, %v1527
  %v1692 = vmul.f32 %v1686, %v1528
  %v1693 = vmul.f32 %v1686, %v1529
  %v1701 = vrot.slane %v1687, 4
  %v1702 = vrot.slane %v1688, 4
  %v1703 = vsel %vm317, %v1701, %v1702
  %v1704 = vrot.slane %v1689, 4
  %v1705 = vsel %vm317, %v1702, %v1704
  %v1706 = vrot.slane %v1690, 4
  %v1707 = vsel %vm317, %v1704, %v1706
  %v1708 = vrot.slane %v1691, 4
  %v1709 = vsel %vm317, %v1706, %v1708
  %v1710 = vrot.slane %v1692, 4
  %v1711 = vsel %vm317, %v1708, %v1710
  %v1712 = vrot.slane %v1693, 4
  %v1713 = vsel %vm317, %v1710, %v1712
  %v1721 = vadd.f32 %v1676, %v1703
  %v1722 = vadd.f32 %v1677, %v1705
  %v1723 = vadd.f32 %v1678, %v1707
  %v1724 = vadd.f32 %v1679, %v1709
  %v1725 = vadd.f32 %v1680, %v1711
  %v1726 = vadd.f32 %v1681, %v1713
  %v1727 = vadd.f32 %v1682, %v1712
  %1728 = vrot.lane.b32.xlu0 %v823, 125
  %v1729 = vpop.permute.xlu0 %1728
  %1730 = vrot.lane.b32.xlu0 %v824, 125
  %v1731 = vpop.permute.xlu0 %1730
  %1732 = vrot.lane.b32.xlu0 %v825, 125
  %v1733 = vpop.permute.xlu0 %1732
  %1734 = vrot.lane.b32.xlu0 %v826, 125
  %v1735 = vpop.permute.xlu0 %1734
  %1736 = vrot.lane.b32.xlu0 %v827, 125
  %v1737 = vpop.permute.xlu0 %1736
  %1738 = vrot.lane.b32.xlu0 %v828, 125
  %v1739 = vpop.permute.xlu0 %1738
  %1740 = vrot.lane.b32.xlu0 %v829, 125
  %v1741 = vpop.permute.xlu0 %1740
  %1749 = vrot.lane.b32.xlu0 %v823, 29
  %v1750 = vpop.permute.xlu0 %1749
  %1751 = vrot.lane.b32.xlu0 %v824, 29
  %v1752 = vpop.permute.xlu0 %1751
  %1753 = vrot.lane.b32.xlu0 %v825, 29
  %v1754 = vpop.permute.xlu0 %1753
  %1755 = vrot.lane.b32.xlu0 %v826, 29
  %v1756 = vpop.permute.xlu0 %1755
  %1757 = vrot.lane.b32.xlu0 %v827, 29
  %v1758 = vpop.permute.xlu0 %1757
  %1759 = vrot.lane.b32.xlu0 %v828, 29
  %v1760 = vpop.permute.xlu0 %1759
  %1761 = vrot.lane.b32.xlu0 %v829, 29
  %v1762 = vpop.permute.xlu0 %1761
  %1770 = vrot.lane.b32.xlu0 %v823, 61
  %v1771 = vpop.permute.xlu0 %1770
  %1772 = vrot.lane.b32.xlu0 %v824, 61
  %v1773 = vpop.permute.xlu0 %1772
  %1774 = vrot.lane.b32.xlu0 %v825, 61
  %v1775 = vpop.permute.xlu0 %1774
  %1776 = vrot.lane.b32.xlu0 %v826, 61
  %v1777 = vpop.permute.xlu0 %1776
  %1778 = vrot.lane.b32.xlu0 %v827, 61
  %v1779 = vpop.permute.xlu0 %1778
  %1780 = vrot.lane.b32.xlu0 %v828, 61
  %v1781 = vpop.permute.xlu0 %1780
  %1782 = vrot.lane.b32.xlu0 %v829, 61
  %v1783 = vpop.permute.xlu0 %1782
  %1791 = vrot.lane.b32.xlu0 %v823, 93
  %v1792 = vpop.permute.xlu0 %1791
  %1793 = vrot.lane.b32.xlu0 %v824, 93
  %v1794 = vpop.permute.xlu0 %1793
  %1795 = vrot.lane.b32.xlu0 %v825, 93
  %v1796 = vpop.permute.xlu0 %1795
  %1797 = vrot.lane.b32.xlu0 %v826, 93
  %v1798 = vpop.permute.xlu0 %1797
  %1799 = vrot.lane.b32.xlu0 %v827, 93
  %v1800 = vpop.permute.xlu0 %1799
  %1801 = vrot.lane.b32.xlu0 %v828, 93
  %v1802 = vpop.permute.xlu0 %1801
  %1803 = vrot.lane.b32.xlu0 %v829, 93
  %v1804 = vpop.permute.xlu0 %1803
  %v1812 = vsel %vm900, %v1729, %v1750
  %v1813 = vsel %vm900, %v1731, %v1752
  %v1814 = vsel %vm900, %v1733, %v1754
  %v1815 = vsel %vm900, %v1735, %v1756
  %v1816 = vsel %vm900, %v1737, %v1758
  %v1817 = vsel %vm900, %v1739, %v1760
  %v1818 = vsel %vm900, %v1741, %v1762
  %v1819 = vsel %vm908, %v1812, %v1771
  %v1820 = vsel %vm908, %v1813, %v1773
  %v1821 = vsel %vm908, %v1814, %v1775
  %v1822 = vsel %vm908, %v1815, %v1777
  %v1823 = vsel %vm908, %v1816, %v1779
  %v1824 = vsel %vm908, %v1817, %v1781
  %v1825 = vsel %vm908, %v1818, %v1783
  %v1826 = vsel %vm916, %v1819, %v1792
  %v1827 = vsel %vm916, %v1820, %v1794
  %v1828 = vsel %vm916, %v1821, %v1796
  %v1829 = vsel %vm916, %v1822, %v1798
  %v1830 = vsel %vm916, %v1823, %v1800
  %v1831 = vsel %vm916, %v1824, %v1802
  %v1832 = vsel %vm916, %v1825, %v1804
  %v1833 = vlaneseq
  %v1834 = vshrl.u32 %v1833, 7
  %v1835 = vsub.s32 3, %v1834
  %v1836 = vrot.slane %v815, %v1835
  %v1837 = vmul.f32 %v1836, %v1826
  %v1838 = vmul.f32 %v1836, %v1827
  %v1839 = vmul.f32 %v1836, %v1828
  %v1840 = vmul.f32 %v1836, %v1829
  %v1841 = vmul.f32 %v1836, %v1830
  %v1842 = vmul.f32 %v1836, %v1831
  %v1843 = vmul.f32 %v1836, %v1832
  %v1844 = vadd.f32 %v1721, %v1837
  %v1845 = vadd.f32 %v1722, %v1838
  %v1846 = vadd.f32 %v1723, %v1839
  %v1847 = vadd.f32 %v1724, %v1840
  %v1848 = vadd.f32 %v1725, %v1841
  %v1849 = vadd.f32 %v1726, %v1842
  %v1850 = vadd.f32 %v1727, %v1843
  %v1851 = vlaneseq
  %v1852 = vshrl.u32 %v1851, 7
  %v1853 = vsub.s32 0, %v1852
  %v1854 = vrot.slane %v816, %v1853
  %v1855 = vmul.f32 %v1854, %v1826
  %v1856 = vmul.f32 %v1854, %v1827
  %v1857 = vmul.f32 %v1854, %v1828
  %v1858 = vmul.f32 %v1854, %v1829
  %v1859 = vmul.f32 %v1854, %v1830
  %v1860 = vmul.f32 %v1854, %v1831
  %v1861 = vmul.f32 %v1854, %v1832
  %v1869 = vrot.slane %v1855, 1
  %v1870 = vrot.slane %v1856, 1
  %v1871 = vsel %vm263, %v1869, %v1870
  %v1872 = vrot.slane %v1857, 1
  %v1873 = vsel %vm263, %v1870, %v1872
  %v1874 = vrot.slane %v1858, 1
  %v1875 = vsel %vm263, %v1872, %v1874
  %v1876 = vrot.slane %v1859, 1
  %v1877 = vsel %vm263, %v1874, %v1876
  %v1878 = vrot.slane %v1860, 1
  %v1879 = vsel %vm263, %v1876, %v1878
  %v1880 = vrot.slane %v1861, 1
  %v1881 = vsel %vm263, %v1878, %v1880
  %v1889 = vadd.f32 %v1844, %v1871
  %v1890 = vadd.f32 %v1845, %v1873
  %v1891 = vadd.f32 %v1846, %v1875
  %v1892 = vadd.f32 %v1847, %v1877
  %v1893 = vadd.f32 %v1848, %v1879
  %v1894 = vadd.f32 %v1849, %v1881
  %v1895 = vadd.f32 %v1850, %v1880
  %v1896 = vlaneseq
  %v1897 = vshrl.u32 %v1896, 7
  %v1898 = vsub.s32 5, %v1897
  %v1899 = vrot.slane %v816, %v1898
  %v1900 = vmul.f32 %v1899, %v1826
  %v1901 = vmul.f32 %v1899, %v1827
  %v1902 = vmul.f32 %v1899, %v1828
  %v1903 = vmul.f32 %v1899, %v1829
  %v1904 = vmul.f32 %v1899, %v1830
  %v1905 = vmul.f32 %v1899, %v1831
  %v1906 = vmul.f32 %v1899, %v1832
  %v1914 = vrot.slane %v1900, 2
  %v1915 = vrot.slane %v1901, 2
  %v1916 = vsel %vm279, %v1914, %v1915
  %v1917 = vrot.slane %v1902, 2
  %v1918 = vsel %vm279, %v1915, %v1917
  %v1919 = vrot.slane %v1903, 2
  %v1920 = vsel %vm279, %v1917, %v1919
  %v1921 = vrot.slane %v1904, 2
  %v1922 = vsel %vm279, %v1919, %v1921
  %v1923 = vrot.slane %v1905, 2
  %v1924 = vsel %vm279, %v1921, %v1923
  %v1925 = vrot.slane %v1906, 2
  %v1926 = vsel %vm279, %v1923, %v1925
  %v1934 = vadd.f32 %v1889, %v1916
  %v1935 = vadd.f32 %v1890, %v1918
  %v1936 = vadd.f32 %v1891, %v1920
  %v1937 = vadd.f32 %v1892, %v1922
  %v1938 = vadd.f32 %v1893, %v1924
  %v1939 = vadd.f32 %v1894, %v1926
  %v1940 = vadd.f32 %v1895, %v1925
  %v1941 = vlaneseq
  %v1942 = vshrl.u32 %v1941, 7
  %v1943 = vsub.s32 2, %v1942
  %v1944 = vrot.slane %v817, %v1943
  %v1945 = vmul.f32 %v1944, %v1826
  %v1946 = vmul.f32 %v1944, %v1827
  %v1947 = vmul.f32 %v1944, %v1828
  %v1948 = vmul.f32 %v1944, %v1829
  %v1949 = vmul.f32 %v1944, %v1830
  %v1950 = vmul.f32 %v1944, %v1831
  %v1951 = vmul.f32 %v1944, %v1832
  %v1959 = vrot.slane %v1945, 3
  %v1960 = vrot.slane %v1946, 3
  %v1961 = vsel %vm297, %v1959, %v1960
  %v1962 = vrot.slane %v1947, 3
  %v1963 = vsel %vm297, %v1960, %v1962
  %v1964 = vrot.slane %v1948, 3
  %v1965 = vsel %vm297, %v1962, %v1964
  %v1966 = vrot.slane %v1949, 3
  %v1967 = vsel %vm297, %v1964, %v1966
  %v1968 = vrot.slane %v1950, 3
  %v1969 = vsel %vm297, %v1966, %v1968
  %v1970 = vrot.slane %v1951, 3
  %v1971 = vsel %vm297, %v1968, %v1970
  %v1979 = vadd.f32 %v1934, %v1961
  %v1980 = vadd.f32 %v1935, %v1963
  %v1981 = vadd.f32 %v1936, %v1965
  %v1982 = vadd.f32 %v1937, %v1967
  %v1983 = vadd.f32 %v1938, %v1969
  %v1984 = vadd.f32 %v1939, %v1971
  %v1985 = vadd.f32 %v1940, %v1970
  %v1986 = vlaneseq
  %v1987 = vshrl.u32 %v1986, 7
  %v1988 = vsub.s32 7, %v1987
  %v1989 = vrot.slane %v817, %v1988
  %v1990 = vmul.f32 %v1989, %v1826
  %v1991 = vmul.f32 %v1989, %v1827
  %v1992 = vmul.f32 %v1989, %v1828
  %v1993 = vmul.f32 %v1989, %v1829
  %v1994 = vmul.f32 %v1989, %v1830
  %v1995 = vmul.f32 %v1989, %v1831
  %v1996 = vmul.f32 %v1989, %v1832
  %v2004 = vrot.slane %v1990, 4
  %v2005 = vrot.slane %v1991, 4
  %v2006 = vsel %vm317, %v2004, %v2005
  %v2007 = vrot.slane %v1992, 4
  %v2008 = vsel %vm317, %v2005, %v2007
  %v2009 = vrot.slane %v1993, 4
  %v2010 = vsel %vm317, %v2007, %v2009
  %v2011 = vrot.slane %v1994, 4
  %v2012 = vsel %vm317, %v2009, %v2011
  %v2013 = vrot.slane %v1995, 4
  %v2014 = vsel %vm317, %v2011, %v2013
  %v2015 = vrot.slane %v1996, 4
  %v2016 = vsel %vm317, %v2013, %v2015
  %v2024 = vadd.f32 %v1979, %v2006
  %v2025 = vadd.f32 %v1980, %v2008
  %v2026 = vadd.f32 %v1981, %v2010
  %v2027 = vadd.f32 %v1982, %v2012
  %v2028 = vadd.f32 %v1983, %v2014
  %v2029 = vadd.f32 %v1984, %v2016
  %v2030 = vadd.f32 %v1985, %v2015
  %2031 = vrot.lane.b32.xlu0 %v823, 124
  %v2032 = vpop.permute.xlu0 %2031
  %2033 = vrot.lane.b32.xlu0 %v824, 124
  %v2034 = vpop.permute.xlu0 %2033
  %2035 = vrot.lane.b32.xlu0 %v825, 124
  %v2036 = vpop.permute.xlu0 %2035
  %2037 = vrot.lane.b32.xlu0 %v826, 124
  %v2038 = vpop.permute.xlu0 %2037
  %2039 = vrot.lane.b32.xlu0 %v827, 124
  %v2040 = vpop.permute.xlu0 %2039
  %2041 = vrot.lane.b32.xlu0 %v828, 124
  %v2042 = vpop.permute.xlu0 %2041
  %2043 = vrot.lane.b32.xlu0 %v829, 124
  %v2044 = vpop.permute.xlu0 %2043
  %2052 = vrot.lane.b32.xlu0 %v823, 28
  %v2053 = vpop.permute.xlu0 %2052
  %2054 = vrot.lane.b32.xlu0 %v824, 28
  %v2055 = vpop.permute.xlu0 %2054
  %2056 = vrot.lane.b32.xlu0 %v825, 28
  %v2057 = vpop.permute.xlu0 %2056
  %2058 = vrot.lane.b32.xlu0 %v826, 28
  %v2059 = vpop.permute.xlu0 %2058
  %2060 = vrot.lane.b32.xlu0 %v827, 28
  %v2061 = vpop.permute.xlu0 %2060
  %2062 = vrot.lane.b32.xlu0 %v828, 28
  %v2063 = vpop.permute.xlu0 %2062
  %2064 = vrot.lane.b32.xlu0 %v829, 28
  %v2065 = vpop.permute.xlu0 %2064
  %2073 = vrot.lane.b32.xlu0 %v823, 60
  %v2074 = vpop.permute.xlu0 %2073
  %2075 = vrot.lane.b32.xlu0 %v824, 60
  %v2076 = vpop.permute.xlu0 %2075
  %2077 = vrot.lane.b32.xlu0 %v825, 60
  %v2078 = vpop.permute.xlu0 %2077
  %2079 = vrot.lane.b32.xlu0 %v826, 60
  %v2080 = vpop.permute.xlu0 %2079
  %2081 = vrot.lane.b32.xlu0 %v827, 60
  %v2082 = vpop.permute.xlu0 %2081
  %2083 = vrot.lane.b32.xlu0 %v828, 60
  %v2084 = vpop.permute.xlu0 %2083
  %2085 = vrot.lane.b32.xlu0 %v829, 60
  %v2086 = vpop.permute.xlu0 %2085
  %2094 = vrot.lane.b32.xlu0 %v823, 92
  %v2095 = vpop.permute.xlu0 %2094
  %2096 = vrot.lane.b32.xlu0 %v824, 92
  %v2097 = vpop.permute.xlu0 %2096
  %2098 = vrot.lane.b32.xlu0 %v825, 92
  %v2099 = vpop.permute.xlu0 %2098
  %2100 = vrot.lane.b32.xlu0 %v826, 92
  %v2101 = vpop.permute.xlu0 %2100
  %2102 = vrot.lane.b32.xlu0 %v827, 92
  %v2103 = vpop.permute.xlu0 %2102
  %2104 = vrot.lane.b32.xlu0 %v828, 92
  %v2105 = vpop.permute.xlu0 %2104
  %2106 = vrot.lane.b32.xlu0 %v829, 92
  %v2107 = vpop.permute.xlu0 %2106
  %v2115 = vsel %vm900, %v2032, %v2053
  %v2116 = vsel %vm900, %v2034, %v2055
  %v2117 = vsel %vm900, %v2036, %v2057
  %v2118 = vsel %vm900, %v2038, %v2059
  %v2119 = vsel %vm900, %v2040, %v2061
  %v2120 = vsel %vm900, %v2042, %v2063
  %v2121 = vsel %vm900, %v2044, %v2065
  %v2122 = vsel %vm908, %v2115, %v2074
  %v2123 = vsel %vm908, %v2116, %v2076
  %v2124 = vsel %vm908, %v2117, %v2078
  %v2125 = vsel %vm908, %v2118, %v2080
  %v2126 = vsel %vm908, %v2119, %v2082
  %v2127 = vsel %vm908, %v2120, %v2084
  %v2128 = vsel %vm908, %v2121, %v2086
  %v2129 = vsel %vm916, %v2122, %v2095
  %v2130 = vsel %vm916, %v2123, %v2097
  %v2131 = vsel %vm916, %v2124, %v2099
  %v2132 = vsel %vm916, %v2125, %v2101
  %v2133 = vsel %vm916, %v2126, %v2103
  %v2134 = vsel %vm916, %v2127, %v2105
  %v2135 = vsel %vm916, %v2128, %v2107
  %v2136 = vlaneseq
  %v2137 = vshrl.u32 %v2136, 7
  %v2138 = vsub.s32 4, %v2137
  %v2139 = vrot.slane %v815, %v2138
  %v2140 = vmul.f32 %v2139, %v2129
  %v2141 = vmul.f32 %v2139, %v2130
  %v2142 = vmul.f32 %v2139, %v2131
  %v2143 = vmul.f32 %v2139, %v2132
  %v2144 = vmul.f32 %v2139, %v2133
  %v2145 = vmul.f32 %v2139, %v2134
  %v2146 = vmul.f32 %v2139, %v2135
  %v2147 = vadd.f32 %v2024, %v2140
  %v2148 = vadd.f32 %v2025, %v2141
  %v2149 = vadd.f32 %v2026, %v2142
  %v2150 = vadd.f32 %v2027, %v2143
  %v2151 = vadd.f32 %v2028, %v2144
  %v2152 = vadd.f32 %v2029, %v2145
  %v2153 = vadd.f32 %v2030, %v2146
  %v2154 = vlaneseq
  %v2155 = vshrl.u32 %v2154, 7
  %v2156 = vsub.s32 1, %v2155
  %v2157 = vrot.slane %v816, %v2156
  %v2158 = vmul.f32 %v2157, %v2129
  %v2159 = vmul.f32 %v2157, %v2130
  %v2160 = vmul.f32 %v2157, %v2131
  %v2161 = vmul.f32 %v2157, %v2132
  %v2162 = vmul.f32 %v2157, %v2133
  %v2163 = vmul.f32 %v2157, %v2134
  %v2164 = vmul.f32 %v2157, %v2135
  %v2172 = vrot.slane %v2158, 1
  %v2173 = vrot.slane %v2159, 1
  %v2174 = vsel %vm263, %v2172, %v2173
  %v2175 = vrot.slane %v2160, 1
  %v2176 = vsel %vm263, %v2173, %v2175
  %v2177 = vrot.slane %v2161, 1
  %v2178 = vsel %vm263, %v2175, %v2177
  %v2179 = vrot.slane %v2162, 1
  %v2180 = vsel %vm263, %v2177, %v2179
  %v2181 = vrot.slane %v2163, 1
  %v2182 = vsel %vm263, %v2179, %v2181
  %v2183 = vrot.slane %v2164, 1
  %v2184 = vsel %vm263, %v2181, %v2183
  %v2192 = vadd.f32 %v2147, %v2174
  %v2193 = vadd.f32 %v2148, %v2176
  %v2194 = vadd.f32 %v2149, %v2178
  %v2195 = vadd.f32 %v2150, %v2180
  %v2196 = vadd.f32 %v2151, %v2182
  %v2197 = vadd.f32 %v2152, %v2184
  %v2198 = vadd.f32 %v2153, %v2183
  %v2199 = vlaneseq
  %v2200 = vshrl.u32 %v2199, 7
  %v2201 = vsub.s32 6, %v2200
  %v2202 = vrot.slane %v816, %v2201
  %v2203 = vmul.f32 %v2202, %v2129
  %v2204 = vmul.f32 %v2202, %v2130
  %v2205 = vmul.f32 %v2202, %v2131
  %v2206 = vmul.f32 %v2202, %v2132
  %v2207 = vmul.f32 %v2202, %v2133
  %v2208 = vmul.f32 %v2202, %v2134
  %v2209 = vmul.f32 %v2202, %v2135
  %v2217 = vrot.slane %v2203, 2
  %v2218 = vrot.slane %v2204, 2
  %v2219 = vsel %vm279, %v2217, %v2218
  %v2220 = vrot.slane %v2205, 2
  %v2221 = vsel %vm279, %v2218, %v2220
  %v2222 = vrot.slane %v2206, 2
  %v2223 = vsel %vm279, %v2220, %v2222
  %v2224 = vrot.slane %v2207, 2
  %v2225 = vsel %vm279, %v2222, %v2224
  %v2226 = vrot.slane %v2208, 2
  %v2227 = vsel %vm279, %v2224, %v2226
  %v2228 = vrot.slane %v2209, 2
  %v2229 = vsel %vm279, %v2226, %v2228
  %v2237 = vadd.f32 %v2192, %v2219
  %v2238 = vadd.f32 %v2193, %v2221
  %v2239 = vadd.f32 %v2194, %v2223
  %v2240 = vadd.f32 %v2195, %v2225
  %v2241 = vadd.f32 %v2196, %v2227
  %v2242 = vadd.f32 %v2197, %v2229
  %v2243 = vadd.f32 %v2198, %v2228
  %v2244 = vlaneseq
  %v2245 = vshrl.u32 %v2244, 7
  %v2246 = vsub.s32 3, %v2245
  %v2247 = vrot.slane %v817, %v2246
  %v2248 = vmul.f32 %v2247, %v2129
  %v2249 = vmul.f32 %v2247, %v2130
  %v2250 = vmul.f32 %v2247, %v2131
  %v2251 = vmul.f32 %v2247, %v2132
  %v2252 = vmul.f32 %v2247, %v2133
  %v2253 = vmul.f32 %v2247, %v2134
  %v2254 = vmul.f32 %v2247, %v2135
  %v2262 = vrot.slane %v2248, 3
  %v2263 = vrot.slane %v2249, 3
  %v2264 = vsel %vm297, %v2262, %v2263
  %v2265 = vrot.slane %v2250, 3
  %v2266 = vsel %vm297, %v2263, %v2265
  %v2267 = vrot.slane %v2251, 3
  %v2268 = vsel %vm297, %v2265, %v2267
  %v2269 = vrot.slane %v2252, 3
  %v2270 = vsel %vm297, %v2267, %v2269
  %v2271 = vrot.slane %v2253, 3
  %v2272 = vsel %vm297, %v2269, %v2271
  %v2273 = vrot.slane %v2254, 3
  %v2274 = vsel %vm297, %v2271, %v2273
  %v2282 = vadd.f32 %v2237, %v2264
  %v2283 = vadd.f32 %v2238, %v2266
  %v2284 = vadd.f32 %v2239, %v2268
  %v2285 = vadd.f32 %v2240, %v2270
  %v2286 = vadd.f32 %v2241, %v2272
  %v2287 = vadd.f32 %v2242, %v2274
  %v2288 = vadd.f32 %v2243, %v2273
  %v2289 = vlaneseq
  %v2290 = vshrl.u32 %v2289, 7
  %v2291 = vsub.s32 0, %v2290
  %v2292 = vrot.slane %v818, %v2291
  %v2293 = vmul.f32 %v2292, %v2129
  %v2294 = vmul.f32 %v2292, %v2130
  %v2295 = vmul.f32 %v2292, %v2131
  %v2296 = vmul.f32 %v2292, %v2132
  %v2297 = vmul.f32 %v2292, %v2133
  %v2298 = vmul.f32 %v2292, %v2134
  %v2299 = vmul.f32 %v2292, %v2135
  %v2307 = vrot.slane %v2293, 4
  %v2308 = vrot.slane %v2294, 4
  %v2309 = vsel %vm317, %v2307, %v2308
  %v2310 = vrot.slane %v2295, 4
  %v2311 = vsel %vm317, %v2308, %v2310
  %v2312 = vrot.slane %v2296, 4
  %v2313 = vsel %vm317, %v2310, %v2312
  %v2314 = vrot.slane %v2297, 4
  %v2315 = vsel %vm317, %v2312, %v2314
  %v2316 = vrot.slane %v2298, 4
  %v2317 = vsel %vm317, %v2314, %v2316
  %v2318 = vrot.slane %v2299, 4
  %v2319 = vsel %vm317, %v2316, %v2318
  %v2327 = vadd.f32 %v2282, %v2309
  %v2328 = vadd.f32 %v2283, %v2311
  %v2329 = vadd.f32 %v2284, %v2313
  %v2330 = vadd.f32 %v2285, %v2315
  %v2331 = vadd.f32 %v2286, %v2317
  %v2332 = vadd.f32 %v2287, %v2319
  %v2333 = vadd.f32 %v2288, %v2318
  %2334 = vst [vmem:[%s4] sm:$0xff] %v2327
  %2335 = vst [vmem:[%s4 + $0x8] sm:$0xff] %v2328
  %2336 = vst [vmem:[%s4 + $0x10] sm:$0xff] %v2329
  %2337 = vst [vmem:[%s4 + $0x18] sm:$0xff] %v2330
  %2338 = vst [vmem:[%s4 + $0x20] sm:$0xff] %v2331
  %2339 = vst [vmem:[%s4 + $0x28] sm:$0xff] %v2332
  %2340 = vst [vmem:[%s4 + $0x30] sm:$0x3] %v2333
  // Predicated region
  $region14: #{model_forward.1} parent=0 // pred_check
    _
  $region15: #{model_forward.1} parent=0 // pred_check_branch
    %2342 = sbr.rel (0) target = $region17
  $region16: #{model_forward.1} parent=0 // pred_region
    _
  $region17: #{model_forward.1} parent=0 // pred_fallthru
    _
  // Predicated region
  $region18: #{model_forward.1} parent=0 // pred_check
    _
  $region19: #{model_forward.1} parent=0 // pred_check_branch
    %2344 = sbr.rel (0) target = $region21
  $region20: #{model_forward.1} parent=0 // pred_region
    _
  $region21: #{model_forward.1} parent=0 // pred_fallthru
    _
  // Predicated region
  $region22: #{model_forward.1} parent=0 // pred_check
    _
  $region23: #{model_forward.1} parent=0 // pred_check_branch
    %2346 = sbr.rel (0) target = $region25
  $region24: #{model_forward.1} parent=0 // pred_region
    _
  $region25: #{model_forward.1} parent=0 // pred_fallthru
    _
  // Predicated region
  $region26: #{model_forward.1} parent=0 // pred_check
    _
  $region27: #{model_forward.1} parent=0 // pred_check_branch
    %2348 = sbr.rel (0) target = $region29
  $region28: #{model_forward.1} parent=0 // pred_region
    _
  $region29: #{model_forward.1} parent=0 // pred_fallthru
    _

</llo_original>
